<compile_context>
chip_gen: v7x
topology: tpu7x:2x2x1
jax: 0.10.0
libtpu: 0.0.40
codegen_flags: <defaults>
</compile_context>

<pallas_src>
import jax
import jax.numpy as jnp
from jax.experimental import pallas as pl
from jax.experimental.pallas import tpu as pltpu


_LAYER_DIMS = [(784, 128), (128, 64), (64, 12), (12, 3),     # encoder
               (3, 12), (12, 64), (64, 128), (128, 784)]     # decoder
_LANE = 128
# Which side of each weight gets zero-padded to a 128 multiple. The kernel-facing
# dims (784-wide input/output) are NOT padded so the kernel reads/writes exactly
# the arrays the wrapper returns. Hidden dims (incl. the latent slab) are padded
# so intermediate activations are lane-dense.
_PAD_IN = [False, True, True, True, True, True, True, True]
_PAD_OUT = [True, True, True, True, True, True, True, False]


def _round_up(n, m):
    return ((n + m - 1) // m) * m


def autoencoder_kernel(x_ref,
                       w1, b1, w2, b2, w3, b3, w4, b4,
                       w5, b5, w6, b6, w7, b7, w8, b8,
                       enc_ref, dec_ref):
    def dense(h, w_ref, b_ref):
        # bf16 MXU matmul with f32 accumulation; bias add stays f32.
        return jnp.dot(h.astype(jnp.bfloat16), w_ref[...],
                       preferred_element_type=jnp.float32) + b_ref[...]

    h = x_ref[...]
    # --- encoder ---  (tanh kept in f32: portable to v5e; on v6e/v7x bf16
    # tanh would be a further EUP win but the kernel is HBM-bound anyway)
    h = jnp.tanh(dense(h, w1, b1))
    h = jnp.tanh(dense(h, w2, b2))
    h = jnp.tanh(dense(h, w3, b3))
    enc = dense(h, w4, b4)                 # (tb, 128) latent slab; lanes 3.. are zero
    enc_ref[...] = enc[:, :enc_ref.shape[1]].astype(enc_ref.dtype)
    # --- decoder ---
    d = jnp.tanh(dense(enc, w5, b5))
    d = jnp.tanh(dense(d, w6, b6))
    d = jnp.tanh(dense(d, w7, b7))
    dec_ref[...] = jax.nn.sigmoid(dense(d, w8, b8)).astype(dec_ref.dtype)


def make_params(key):
    """Deterministic init mimicking PyTorch nn.Linear default: U(-1/sqrt(fan_in), ...).
    Weights are (in, out) (pre-transposed from PyTorch's (out, in)); biases (1, out)."""
    params = []
    for (din, dout) in _LAYER_DIMS:
        key, kw, kb = jax.random.split(key, 3)
        bound = 1.0 / (din ** 0.5)
        w = jax.random.uniform(kw, (din, dout), jnp.float32, -bound, bound)
        b = jax.random.uniform(kb, (1, dout), jnp.float32, -bound, bound)
        params.extend([w, b])
    return params


def pad_params(params, weight_dtype=jnp.bfloat16):
    """Zero-pad hidden dims to 128 lanes and cast weights to bf16.

    Zero padding is semantics-preserving: padded output columns carry 0 through
    tanh(0)=0 (and through the un-activated latent), and the next layer's padded
    weight rows are zero, so padded lanes never contaminate real lanes.
    """
    padded = []
    for li, (din, dout) in enumerate(_LAYER_DIMS):
        w, b = params[2 * li], params[2 * li + 1]
        din_p = _round_up(din, _LANE) if _PAD_IN[li] else din
        dout_p = _round_up(dout, _LANE) if _PAD_OUT[li] else dout
        wp = jnp.zeros((din_p, dout_p), weight_dtype).at[:din, :dout].set(
            w.astype(weight_dtype))
        bp = jnp.zeros((1, dout_p), jnp.float32).at[:, :dout].set(b)
        padded.extend([wp, bp])
    return padded


def _pick_tb(B):
    """Batch tile: single tile for tiny batches, otherwise 128..256 so the grid
    has several steps (DMA/compute overlap + both v7x TensorCores busy) while
    keeping per-step overhead (~0.35 us) negligible."""
    if B <= 128:
        return _round_up(B, 8)
    tb = _round_up(-(-B // 8), 8)          # cdiv(B, 8), multiple of 8
    return int(min(256, max(128, tb)))


def autoencoder_forward(x, padded_params, tb=None, out_dtype=jnp.bfloat16):
    """x: (B, 784). Returns (encoded (B, 3), decoded (B, 784)) in out_dtype."""
    B, D = x.shape
    assert D == 784
    tb = _pick_tb(B) if tb is None else max(8, min(tb, _round_up(B, 8)))
    bp = _round_up(B, tb)

    if bp != B:
        # Batch-row pad only; done in bf16 to halve the extra pad pass.
        xk = jnp.zeros((bp, 784), jnp.bfloat16).at[:B].set(x.astype(jnp.bfloat16))
    else:
        xk = x   # no wrapper pre-pass: kernel reads x directly, casts at the dot

    grid = (bp // tb,)

    # Every weight/bias is a full-extent block, replicated across the batch grid
    # (grid-invariant index map => fetched once).
    param_specs = [pl.BlockSpec(p.shape, lambda i: (0, 0)) for p in padded_params]

    enc, dec = pl.pallas_call(
        autoencoder_kernel,
        out_shape=(jax.ShapeDtypeStruct((bp, 3), out_dtype),
                   jax.ShapeDtypeStruct((bp, 784), out_dtype)),
        grid_spec=pltpu.PrefetchScalarGridSpec(
            num_scalar_prefetch=0,
            grid=grid,
            in_specs=[pl.BlockSpec((tb, 784), lambda i: (i, 0))] + param_specs,
            out_specs=[pl.BlockSpec((tb, 3), lambda i: (i, 0)),
                       pl.BlockSpec((tb, 784), lambda i: (i, 0))],
        ),
        compiler_params=pltpu.CompilerParams(
            dimension_semantics=("parallel",)),
    )(xk, *padded_params)

    if bp != B:
        enc, dec = enc[:B], dec[:B]
    return enc, dec


def reference_forward(x, params):
    """Pure-JAX f32 reference (mirrors the PyTorch module, unpadded weights)."""
    w1, b1, w2, b2, w3, b3, w4, b4, w5, b5, w6, b6, w7, b7, w8, b8 = params
    h = jnp.tanh(x @ w1 + b1)
    h = jnp.tanh(h @ w2 + b2)
    h = jnp.tanh(h @ w3 + b3)
    enc = h @ w4 + b4
    d = jnp.tanh(enc @ w5 + b5)
    d = jnp.tanh(d @ w6 + b6)
    d = jnp.tanh(d @ w7 + b7)
    dec = jax.nn.sigmoid(d @ w8 + b8)
    return enc, dec


if __name__ == "__main__":
    key = jax.random.PRNGKey(0)
    k_x, k_p = jax.random.split(key)

    batch = 2
    x = jax.random.uniform(k_x, (batch, 28 * 28), jnp.float32)  # MNIST-like pixels in [0, 1)
    params = make_params(k_p)
    padded_params = pad_params(params)

    enc, dec = autoencoder_forward(x, padded_params)
    enc = jax.block_until_ready(enc)
    dec = jax.block_until_ready(dec)

    enc_ref, dec_ref = reference_forward(x, params)
    assert enc.shape == (batch, 3) and dec.shape == (batch, 784)
    enc_f32 = enc.astype(jnp.float32)
    dec_f32 = dec.astype(jnp.float32)
    # bf16 GEMMs + bf16 outputs vs f32 reference -> loosened tolerance.
    assert jnp.allclose(enc_f32, enc_ref, atol=3e-2), float(jnp.max(jnp.abs(enc_f32 - enc_ref)))
    assert jnp.allclose(dec_f32, dec_ref, atol=3e-2), float(jnp.max(jnp.abs(dec_f32 - dec_ref)))

    print("KERNEL_OK")
</pallas_src>

<mosaic_0001>
module attributes {stable_mosaic.version = 11 : i64} {
  func.func @autoencoder_kernel(%arg0: i32, %arg1: memref<8x784xbf16, #tpu.memory_space<vmem>>, %arg2: memref<784x128xbf16, #tpu.memory_space<vmem>>, %arg3: memref<1x128xf32, #tpu.memory_space<vmem>>, %arg4: memref<128x128xbf16, #tpu.memory_space<vmem>>, %arg5: memref<1x128xf32, #tpu.memory_space<vmem>>, %arg6: memref<128x128xbf16, #tpu.memory_space<vmem>>, %arg7: memref<1x128xf32, #tpu.memory_space<vmem>>, %arg8: memref<128x128xbf16, #tpu.memory_space<vmem>>, %arg9: memref<1x128xf32, #tpu.memory_space<vmem>>, %arg10: memref<128x128xbf16, #tpu.memory_space<vmem>>, %arg11: memref<1x128xf32, #tpu.memory_space<vmem>>, %arg12: memref<128x128xbf16, #tpu.memory_space<vmem>>, %arg13: memref<1x128xf32, #tpu.memory_space<vmem>>, %arg14: memref<128x128xbf16, #tpu.memory_space<vmem>>, %arg15: memref<1x128xf32, #tpu.memory_space<vmem>>, %arg16: memref<128x784xbf16, #tpu.memory_space<vmem>>, %arg17: memref<1x784xf32, #tpu.memory_space<vmem>>, %arg18: memref<8x3xbf16, #tpu.memory_space<vmem>>, %arg19: memref<8x784xbf16, #tpu.memory_space<vmem>>) attributes {dimension_semantics = [#tpu.dimension_semantics<parallel>], iteration_bounds = array<i64: 1>, scalar_prefetch = 0 : i64, scratch_operands = 0 : i64, tpu.core_type = #tpu.core_type<tc>, window_params = [{transform_indices = @transform_0, window_bounds = array<i64: 8, 784>}, {pipeline_mode = #tpu.pipeline_mode<synchronous>, transform_indices = @transform_1, window_bounds = array<i64: 784, 128>}, {pipeline_mode = #tpu.pipeline_mode<synchronous>, transform_indices = @transform_2, window_bounds = array<i64: 1, 128>}, {pipeline_mode = #tpu.pipeline_mode<synchronous>, transform_indices = @transform_3, window_bounds = array<i64: 128, 128>}, {pipeline_mode = #tpu.pipeline_mode<synchronous>, transform_indices = @transform_4, window_bounds = array<i64: 1, 128>}, {pipeline_mode = #tpu.pipeline_mode<synchronous>, transform_indices = @transform_5, window_bounds = array<i64: 128, 128>}, {pipeline_mode = #tpu.pipeline_mode<synchronous>, transform_indices = @transform_6, window_bounds = array<i64: 1, 128>}, {pipeline_mode = #tpu.pipeline_mode<synchronous>, transform_indices = @transform_7, window_bounds = array<i64: 128, 128>}, {pipeline_mode = #tpu.pipeline_mode<synchronous>, transform_indices = @transform_8, window_bounds = array<i64: 1, 128>}, {pipeline_mode = #tpu.pipeline_mode<synchronous>, transform_indices = @transform_9, window_bounds = array<i64: 128, 128>}, {pipeline_mode = #tpu.pipeline_mode<synchronous>, transform_indices = @transform_10, window_bounds = array<i64: 1, 128>}, {pipeline_mode = #tpu.pipeline_mode<synchronous>, transform_indices = @transform_11, window_bounds = array<i64: 128, 128>}, {pipeline_mode = #tpu.pipeline_mode<synchronous>, transform_indices = @transform_12, window_bounds = array<i64: 1, 128>}, {pipeline_mode = #tpu.pipeline_mode<synchronous>, transform_indices = @transform_13, window_bounds = array<i64: 128, 128>}, {pipeline_mode = #tpu.pipeline_mode<synchronous>, transform_indices = @transform_14, window_bounds = array<i64: 1, 128>}, {pipeline_mode = #tpu.pipeline_mode<synchronous>, transform_indices = @transform_15, window_bounds = array<i64: 128, 784>}, {pipeline_mode = #tpu.pipeline_mode<synchronous>, transform_indices = @transform_16, window_bounds = array<i64: 1, 784>}, {transform_indices = @transform_17, window_bounds = array<i64: 8, 3>}, {transform_indices = @transform_18, window_bounds = array<i64: 8, 784>}]} {
    %c0 = arith.constant 0 : index
    %c0_0 = arith.constant 0 : index
    %0 = vector.load %arg1[%c0, %c0_0] : memref<8x784xbf16, #tpu.memory_space<vmem>>, vector<8x784xbf16>
    %c0_1 = arith.constant 0 : index
    %c0_2 = arith.constant 0 : index
    %1 = vector.load %arg2[%c0_1, %c0_2] : memref<784x128xbf16, #tpu.memory_space<vmem>>, vector<784x128xbf16>
    %cst = arith.constant dense<0.000000e+00> : vector<8x128xf32>
    %2 = tpu.matmul %0, %1, %cst {dimension_numbers = #tpu.dot_dimension_numbers<[1], [0], [0], [1], [0, 0, 1, 1], [], []>} : vector<8x784xbf16>, vector<784x128xbf16>, vector<8x128xf32> -> vector<8x128xf32>
    %c0_3 = arith.constant 0 : index
    %c0_4 = arith.constant 0 : index
    %3 = vector.load %arg3[%c0_3, %c0_4] : memref<1x128xf32, #tpu.memory_space<vmem>>, vector<1x128xf32>
    %4 = vector.broadcast %3 : vector<1x128xf32> to vector<8x128xf32>
    %5 = arith.addf %2, %4 : vector<8x128xf32>
    %6 = math.tanh %5 : vector<8x128xf32>
    %7 = arith.truncf %6 : vector<8x128xf32> to vector<8x128xbf16>
    %c0_5 = arith.constant 0 : index
    %c0_6 = arith.constant 0 : index
    %8 = vector.load %arg4[%c0_5, %c0_6] : memref<128x128xbf16, #tpu.memory_space<vmem>>, vector<128x128xbf16>
    %cst_7 = arith.constant dense<0.000000e+00> : vector<8x128xf32>
    %9 = tpu.matmul %7, %8, %cst_7 {dimension_numbers = #tpu.dot_dimension_numbers<[1], [0], [0], [1], [0, 0, 1, 1], [], []>} : vector<8x128xbf16>, vector<128x128xbf16>, vector<8x128xf32> -> vector<8x128xf32>
    %c0_8 = arith.constant 0 : index
    %c0_9 = arith.constant 0 : index
    %10 = vector.load %arg5[%c0_8, %c0_9] : memref<1x128xf32, #tpu.memory_space<vmem>>, vector<1x128xf32>
    %11 = vector.broadcast %10 : vector<1x128xf32> to vector<8x128xf32>
    %12 = arith.addf %9, %11 : vector<8x128xf32>
    %13 = math.tanh %12 : vector<8x128xf32>
    %14 = arith.truncf %13 : vector<8x128xf32> to vector<8x128xbf16>
    %c0_10 = arith.constant 0 : index
    %c0_11 = arith.constant 0 : index
    %15 = vector.load %arg6[%c0_10, %c0_11] : memref<128x128xbf16, #tpu.memory_space<vmem>>, vector<128x128xbf16>
    %cst_12 = arith.constant dense<0.000000e+00> : vector<8x128xf32>
    %16 = tpu.matmul %14, %15, %cst_12 {dimension_numbers = #tpu.dot_dimension_numbers<[1], [0], [0], [1], [0, 0, 1, 1], [], []>} : vector<8x128xbf16>, vector<128x128xbf16>, vector<8x128xf32> -> vector<8x128xf32>
    %c0_13 = arith.constant 0 : index
    %c0_14 = arith.constant 0 : index
    %17 = vector.load %arg7[%c0_13, %c0_14] : memref<1x128xf32, #tpu.memory_space<vmem>>, vector<1x128xf32>
    %18 = vector.broadcast %17 : vector<1x128xf32> to vector<8x128xf32>
    %19 = arith.addf %16, %18 : vector<8x128xf32>
    %20 = math.tanh %19 : vector<8x128xf32>
    %21 = arith.truncf %20 : vector<8x128xf32> to vector<8x128xbf16>
    %c0_15 = arith.constant 0 : index
    %c0_16 = arith.constant 0 : index
    %22 = vector.load %arg8[%c0_15, %c0_16] : memref<128x128xbf16, #tpu.memory_space<vmem>>, vector<128x128xbf16>
    %cst_17 = arith.constant dense<0.000000e+00> : vector<8x128xf32>
    %23 = tpu.matmul %21, %22, %cst_17 {dimension_numbers = #tpu.dot_dimension_numbers<[1], [0], [0], [1], [0, 0, 1, 1], [], []>} : vector<8x128xbf16>, vector<128x128xbf16>, vector<8x128xf32> -> vector<8x128xf32>
    %c0_18 = arith.constant 0 : index
    %c0_19 = arith.constant 0 : index
    %24 = vector.load %arg9[%c0_18, %c0_19] : memref<1x128xf32, #tpu.memory_space<vmem>>, vector<1x128xf32>
    %25 = vector.broadcast %24 : vector<1x128xf32> to vector<8x128xf32>
    %26 = arith.addf %23, %25 : vector<8x128xf32>
    %27 = vector.extract_strided_slice %26 {offsets = [0, 0], sizes = [8, 3], strides = [1, 1]} : vector<8x128xf32> to vector<8x3xf32>
    %28 = arith.truncf %27 : vector<8x3xf32> to vector<8x3xbf16>
    %c0_20 = arith.constant 0 : index
    %c0_21 = arith.constant 0 : index
    %29 = vector.load %arg18[%c0_20, %c0_21] : memref<8x3xbf16, #tpu.memory_space<vmem>>, vector<8x3xbf16>
    tpu.vector_store %arg18[%c0_20, %c0_21], %28 {strides = array<i32>} : memref<8x3xbf16, #tpu.memory_space<vmem>>, vector<8x3xbf16>,
    %30 = arith.truncf %26 : vector<8x128xf32> to vector<8x128xbf16>
    %c0_22 = arith.constant 0 : index
    %c0_23 = arith.constant 0 : index
    %31 = vector.load %arg10[%c0_22, %c0_23] : memref<128x128xbf16, #tpu.memory_space<vmem>>, vector<128x128xbf16>
    %cst_24 = arith.constant dense<0.000000e+00> : vector<8x128xf32>
    %32 = tpu.matmul %30, %31, %cst_24 {dimension_numbers = #tpu.dot_dimension_numbers<[1], [0], [0], [1], [0, 0, 1, 1], [], []>} : vector<8x128xbf16>, vector<128x128xbf16>, vector<8x128xf32> -> vector<8x128xf32>
    %c0_25 = arith.constant 0 : index
    %c0_26 = arith.constant 0 : index
    %33 = vector.load %arg11[%c0_25, %c0_26] : memref<1x128xf32, #tpu.memory_space<vmem>>, vector<1x128xf32>
    %34 = vector.broadcast %33 : vector<1x128xf32> to vector<8x128xf32>
    %35 = arith.addf %32, %34 : vector<8x128xf32>
    %36 = math.tanh %35 : vector<8x128xf32>
    %37 = arith.truncf %36 : vector<8x128xf32> to vector<8x128xbf16>
    %c0_27 = arith.constant 0 : index
    %c0_28 = arith.constant 0 : index
    %38 = vector.load %arg12[%c0_27, %c0_28] : memref<128x128xbf16, #tpu.memory_space<vmem>>, vector<128x128xbf16>
    %cst_29 = arith.constant dense<0.000000e+00> : vector<8x128xf32>
    %39 = tpu.matmul %37, %38, %cst_29 {dimension_numbers = #tpu.dot_dimension_numbers<[1], [0], [0], [1], [0, 0, 1, 1], [], []>} : vector<8x128xbf16>, vector<128x128xbf16>, vector<8x128xf32> -> vector<8x128xf32>
    %c0_30 = arith.constant 0 : index
    %c0_31 = arith.constant 0 : index
    %40 = vector.load %arg13[%c0_30, %c0_31] : memref<1x128xf32, #tpu.memory_space<vmem>>, vector<1x128xf32>
    %41 = vector.broadcast %40 : vector<1x128xf32> to vector<8x128xf32>
    %42 = arith.addf %39, %41 : vector<8x128xf32>
    %43 = math.tanh %42 : vector<8x128xf32>
    %44 = arith.truncf %43 : vector<8x128xf32> to vector<8x128xbf16>
    %c0_32 = arith.constant 0 : index
    %c0_33 = arith.constant 0 : index
    %45 = vector.load %arg14[%c0_32, %c0_33] : memref<128x128xbf16, #tpu.memory_space<vmem>>, vector<128x128xbf16>
    %cst_34 = arith.constant dense<0.000000e+00> : vector<8x128xf32>
    %46 = tpu.matmul %44, %45, %cst_34 {dimension_numbers = #tpu.dot_dimension_numbers<[1], [0], [0], [1], [0, 0, 1, 1], [], []>} : vector<8x128xbf16>, vector<128x128xbf16>, vector<8x128xf32> -> vector<8x128xf32>
    %c0_35 = arith.constant 0 : index
    %c0_36 = arith.constant 0 : index
    %47 = vector.load %arg15[%c0_35, %c0_36] : memref<1x128xf32, #tpu.memory_space<vmem>>, vector<1x128xf32>
    %48 = vector.broadcast %47 : vector<1x128xf32> to vector<8x128xf32>
    %49 = arith.addf %46, %48 : vector<8x128xf32>
    %50 = math.tanh %49 : vector<8x128xf32>
    %51 = arith.truncf %50 : vector<8x128xf32> to vector<8x128xbf16>
    %c0_37 = arith.constant 0 : index
    %c0_38 = arith.constant 0 : index
    %52 = vector.load %arg16[%c0_37, %c0_38] : memref<128x784xbf16, #tpu.memory_space<vmem>>, vector<128x784xbf16>
    %cst_39 = arith.constant dense<0.000000e+00> : vector<8x784xf32>
    %53 = tpu.matmul %51, %52, %cst_39 {dimension_numbers = #tpu.dot_dimension_numbers<[1], [0], [0], [1], [0, 0, 1, 1], [], []>} : vector<8x128xbf16>, vector<128x784xbf16>, vector<8x784xf32> -> vector<8x784xf32>
    %c0_40 = arith.constant 0 : index
    %c0_41 = arith.constant 0 : index
    %54 = vector.load %arg17[%c0_40, %c0_41] : memref<1x784xf32, #tpu.memory_space<vmem>>, vector<1x784xf32>
    %55 = vector.broadcast %54 : vector<1x784xf32> to vector<8x784xf32>
    %56 = arith.addf %53, %55 : vector<8x784xf32>
    %57 = arith.negf %56 : vector<8x784xf32>
    %58 = math.exp %57 : vector<8x784xf32>
    %cst_42 = arith.constant 1.000000e+00 : f32
    %59 = vector.broadcast %cst_42 : f32 to vector<8x784xf32>
    %60 = arith.addf %59, %58 : vector<8x784xf32>
    %61 = arith.divf %59, %60 : vector<8x784xf32>
    %62 = arith.truncf %61 : vector<8x784xf32> to vector<8x784xbf16>
    %c0_43 = arith.constant 0 : index
    %c0_44 = arith.constant 0 : index
    %63 = vector.load %arg19[%c0_43, %c0_44] : memref<8x784xbf16, #tpu.memory_space<vmem>>, vector<8x784xbf16>
    tpu.vector_store %arg19[%c0_43, %c0_44], %62 {strides = array<i32>} : memref<8x784xbf16, #tpu.memory_space<vmem>>, vector<8x784xbf16>,
    return
  }
  func.func @transform_0(%arg0: i32) -> (i32, i32) {
    %c0_i32 = arith.constant 0 : i32
    %c0_i32_0 = arith.constant 0 : i32
    return %arg0, %c0_i32 : i32, i32
  }
  func.func @transform_1(%arg0: i32) -> (i32, i32) {
    %c0_i32 = arith.constant 0 : i32
    %c0_i32_0 = arith.constant 0 : i32
    %c0_i32_1 = arith.constant 0 : i32
    return %c0_i32, %c0_i32_0 : i32, i32
  }
  func.func @transform_2(%arg0: i32) -> (i32, i32) {
    %c0_i32 = arith.constant 0 : i32
    %c0_i32_0 = arith.constant 0 : i32
    %c0_i32_1 = arith.constant 0 : i32
    return %c0_i32, %c0_i32_0 : i32, i32
  }
  func.func @transform_3(%arg0: i32) -> (i32, i32) {
    %c0_i32 = arith.constant 0 : i32
    %c0_i32_0 = arith.constant 0 : i32
    %c0_i32_1 = arith.constant 0 : i32
    return %c0_i32, %c0_i32_0 : i32, i32
  }
  func.func @transform_4(%arg0: i32) -> (i32, i32) {
    %c0_i32 = arith.constant 0 : i32
    %c0_i32_0 = arith.constant 0 : i32
    %c0_i32_1 = arith.constant 0 : i32
    return %c0_i32, %c0_i32_0 : i32, i32
  }
  func.func @transform_5(%arg0: i32) -> (i32, i32) {
    %c0_i32 = arith.constant 0 : i32
    %c0_i32_0 = arith.constant 0 : i32
    %c0_i32_1 = arith.constant 0 : i32
    return %c0_i32, %c0_i32_0 : i32, i32
  }
  func.func @transform_6(%arg0: i32) -> (i32, i32) {
    %c0_i32 = arith.constant 0 : i32
    %c0_i32_0 = arith.constant 0 : i32
    %c0_i32_1 = arith.constant 0 : i32
    return %c0_i32, %c0_i32_0 : i32, i32
  }
  func.func @transform_7(%arg0: i32) -> (i32, i32) {
    %c0_i32 = arith.constant 0 : i32
    %c0_i32_0 = arith.constant 0 : i32
    %c0_i32_1 = arith.constant 0 : i32
    return %c0_i32, %c0_i32_0 : i32, i32
  }
  func.func @transform_8(%arg0: i32) -> (i32, i32) {
    %c0_i32 = arith.constant 0 : i32
    %c0_i32_0 = arith.constant 0 : i32
    %c0_i32_1 = arith.constant 0 : i32
    return %c0_i32, %c0_i32_0 : i32, i32
  }
  func.func @transform_9(%arg0: i32) -> (i32, i32) {
    %c0_i32 = arith.constant 0 : i32
    %c0_i32_0 = arith.constant 0 : i32
    %c0_i32_1 = arith.constant 0 : i32
    return %c0_i32, %c0_i32_0 : i32, i32
  }
  func.func @transform_10(%arg0: i32) -> (i32, i32) {
    %c0_i32 = arith.constant 0 : i32
    %c0_i32_0 = arith.constant 0 : i32
    %c0_i32_1 = arith.constant 0 : i32
    return %c0_i32, %c0_i32_0 : i32, i32
  }
  func.func @transform_11(%arg0: i32) -> (i32, i32) {
    %c0_i32 = arith.constant 0 : i32
    %c0_i32_0 = arith.constant 0 : i32
    %c0_i32_1 = arith.constant 0 : i32
    return %c0_i32, %c0_i32_0 : i32, i32
  }
  func.func @transform_12(%arg0: i32) -> (i32, i32) {
    %c0_i32 = arith.constant 0 : i32
    %c0_i32_0 = arith.constant 0 : i32
    %c0_i32_1 = arith.constant 0 : i32
    return %c0_i32, %c0_i32_0 : i32, i32
  }
  func.func @transform_13(%arg0: i32) -> (i32, i32) {
    %c0_i32 = arith.constant 0 : i32
    %c0_i32_0 = arith.constant 0 : i32
    %c0_i32_1 = arith.constant 0 : i32
    return %c0_i32, %c0_i32_0 : i32, i32
  }
  func.func @transform_14(%arg0: i32) -> (i32, i32) {
    %c0_i32 = arith.constant 0 : i32
    %c0_i32_0 = arith.constant 0 : i32
    %c0_i32_1 = arith.constant 0 : i32
    return %c0_i32, %c0_i32_0 : i32, i32
  }
  func.func @transform_15(%arg0: i32) -> (i32, i32) {
    %c0_i32 = arith.constant 0 : i32
    %c0_i32_0 = arith.constant 0 : i32
    %c0_i32_1 = arith.constant 0 : i32
    return %c0_i32, %c0_i32_0 : i32, i32
  }
  func.func @transform_16(%arg0: i32) -> (i32, i32) {
    %c0_i32 = arith.constant 0 : i32
    %c0_i32_0 = arith.constant 0 : i32
    %c0_i32_1 = arith.constant 0 : i32
    return %c0_i32, %c0_i32_0 : i32, i32
  }
  func.func @transform_17(%arg0: i32) -> (i32, i32) {
    %c0_i32 = arith.constant 0 : i32
    %c0_i32_0 = arith.constant 0 : i32
    return %arg0, %c0_i32 : i32, i32
  }
  func.func @transform_18(%arg0: i32) -> (i32, i32) {
    %c0_i32 = arith.constant 0 : i32
    %c0_i32_0 = arith.constant 0 : i32
    return %arg0, %c0_i32 : i32, i32
  }
}

</mosaic_0001>

<llo_original>
// kernel: tpu_custom_call.1
$region0: #{tpu_custom_call.1}
  #allocation0 [shape = 'u32[]', space=smem, size = 0x4, offset = 0x4, fixed_abs, tag = 'smem constant byte address 0x4 - core index']
  #allocation1 [shape = 'u32[144,128]{1,0:T(1,128)}', space=vmem, size = 0x12000, scoped, tag = 'internal scratch']
  %s0 = inlined_call_operand.vmem [shape: bf16[8,784], index: 0, kind: input, shape index: {}]
  %s1 = inlined_call_operand.vmem [shape: bf16[784,128], index: 1, kind: input, shape index: {}]
  %s2 = inlined_call_operand.vmem [shape: f32[1,128], index: 2, kind: input, shape index: {}]
  %s3 = inlined_call_operand.vmem [shape: bf16[128,128], index: 3, kind: input, shape index: {}]
  %s4 = inlined_call_operand.vmem [shape: f32[1,128], index: 4, kind: input, shape index: {}]
  %s5 = inlined_call_operand.vmem [shape: bf16[128,128], index: 5, kind: input, shape index: {}]
  %s6 = inlined_call_operand.vmem [shape: f32[1,128], index: 6, kind: input, shape index: {}]
  %s7 = inlined_call_operand.vmem [shape: bf16[128,128], index: 7, kind: input, shape index: {}]
  %s8 = inlined_call_operand.vmem [shape: f32[1,128], index: 8, kind: input, shape index: {}]
  %s9 = inlined_call_operand.vmem [shape: bf16[128,128], index: 9, kind: input, shape index: {}]
  %s10 = inlined_call_operand.vmem [shape: f32[1,128], index: 10, kind: input, shape index: {}]
  %s11 = inlined_call_operand.vmem [shape: bf16[128,128], index: 11, kind: input, shape index: {}]
  %s12 = inlined_call_operand.vmem [shape: f32[1,128], index: 12, kind: input, shape index: {}]
  %s13 = inlined_call_operand.vmem [shape: bf16[128,128], index: 13, kind: input, shape index: {}]
  %s14 = inlined_call_operand.vmem [shape: f32[1,128], index: 14, kind: input, shape index: {}]
  %s15 = inlined_call_operand.vmem [shape: bf16[128,784], index: 15, kind: input, shape index: {}]
  %s16 = inlined_call_operand.vmem [shape: f32[1,784], index: 16, kind: input, shape index: {}]
  %s17 = inlined_call_operand.vmem [shape: bf16[8,3], index: 17, kind: output, shape index: {0}]
  %s18 = inlined_call_operand.hbm [shape: bf16[8,784], index: 18, kind: output, shape index: {1}]
  %19 = xla_tuple %s17, %s18
  %s20 = sld [smem:[#allocation0]]
  $region86: #{tpu_custom_call.1} parent=0
    _
  %s22 = ssub.s32 1, %s20
  %s23 = scalar_select 0, %s22, %s20
  $region1: #{tpu_custom_call.1} parent=0
    #allocation2 [shape = 'u8[14336]{0}', space=vmem, size = 0x3800, scoped, tag = 'output window, operand 1, single buffered']
    #allocation3 [shape = 's32[1]{0}', space=sflag, size = 0x4, scoped, tag = 'scoped memory for tpu_custom_call.1']
    %24 = vsyncpa [#allocation3], 0
    // Predicated region
    $region2: #{tpu_custom_call.1} parent=1 // pred_check
      _
    $region3: #{tpu_custom_call.1} parent=1 // pred_check_branch
      %26 = sbr.rel (0) target = $region5
    $region4: #{tpu_custom_call.1} parent=1 // pred_region
      _
    $region5: #{tpu_custom_call.1} parent=1 // pred_fallthru
      _
    // Predicated region
    $region6: #{tpu_custom_call.1} parent=1 // pred_check
      _
    $region7: #{tpu_custom_call.1} parent=1 // pred_check_branch
      %28 = sbr.rel (0) target = $region9
    $region8: #{tpu_custom_call.1} parent=1 // pred_region
      _
    $region9: #{tpu_custom_call.1} parent=1 // pred_fallthru
      _
    // Predicated region
    $region10: #{tpu_custom_call.1} parent=1 // pred_check
      _
    $region11: #{tpu_custom_call.1} parent=1 // pred_check_branch
      %30 = sbr.rel (0) target = $region13
    $region12: #{tpu_custom_call.1} parent=1 // pred_region
      _
    $region13: #{tpu_custom_call.1} parent=1 // pred_fallthru
      _
    // Predicated region
    $region14: #{tpu_custom_call.1} parent=1 // pred_check
      _
    $region15: #{tpu_custom_call.1} parent=1 // pred_check_branch
      %32 = sbr.rel (0) target = $region17
    $region16: #{tpu_custom_call.1} parent=1 // pred_region
      _
    $region17: #{tpu_custom_call.1} parent=1 // pred_fallthru
      _
    // Predicated region
    $region18: #{tpu_custom_call.1} parent=1 // pred_check
      _
    $region19: #{tpu_custom_call.1} parent=1 // pred_check_branch
      %34 = sbr.rel (0) target = $region21
    $region20: #{tpu_custom_call.1} parent=1 // pred_region
      _
    $region21: #{tpu_custom_call.1} parent=1 // pred_fallthru
      _
    // Predicated region
    $region22: #{tpu_custom_call.1} parent=1 // pred_check
      _
    $region23: #{tpu_custom_call.1} parent=1 // pred_check_branch
      %36 = sbr.rel (0) target = $region25
    $region24: #{tpu_custom_call.1} parent=1 // pred_region
      _
    $region25: #{tpu_custom_call.1} parent=1 // pred_fallthru
      _
    // Predicated region
    $region26: #{tpu_custom_call.1} parent=1 // pred_check
      _
    $region27: #{tpu_custom_call.1} parent=1 // pred_check_branch
      %38 = sbr.rel (0) target = $region29
    $region28: #{tpu_custom_call.1} parent=1 // pred_region
      _
    $region29: #{tpu_custom_call.1} parent=1 // pred_fallthru
      _
    // Predicated region
    $region30: #{tpu_custom_call.1} parent=1 // pred_check
      _
    $region31: #{tpu_custom_call.1} parent=1 // pred_check_branch
      %40 = sbr.rel (0) target = $region33
    $region32: #{tpu_custom_call.1} parent=1 // pred_region
      _
    $region33: #{tpu_custom_call.1} parent=1 // pred_fallthru
      _
    // Predicated region
    $region34: #{tpu_custom_call.1} parent=1 // pred_check
      _
    $region35: #{tpu_custom_call.1} parent=1 // pred_check_branch
      %42 = sbr.rel (0) target = $region37
    $region36: #{tpu_custom_call.1} parent=1 // pred_region
      _
    $region37: #{tpu_custom_call.1} parent=1 // pred_fallthru
      _
    // Predicated region
    $region38: #{tpu_custom_call.1} parent=1 // pred_check
      _
    $region39: #{tpu_custom_call.1} parent=1 // pred_check_branch
      %44 = sbr.rel (0) target = $region41
    $region40: #{tpu_custom_call.1} parent=1 // pred_region
      _
    $region41: #{tpu_custom_call.1} parent=1 // pred_fallthru
      _
    // Predicated region
    $region42: #{tpu_custom_call.1} parent=1 // pred_check
      _
    $region43: #{tpu_custom_call.1} parent=1 // pred_check_branch
      %46 = sbr.rel (0) target = $region45
    $region44: #{tpu_custom_call.1} parent=1 // pred_region
      _
    $region45: #{tpu_custom_call.1} parent=1 // pred_fallthru
      _
    // Predicated region
    $region46: #{tpu_custom_call.1} parent=1 // pred_check
      _
    $region47: #{tpu_custom_call.1} parent=1 // pred_check_branch
      %48 = sbr.rel (0) target = $region49
    $region48: #{tpu_custom_call.1} parent=1 // pred_region
      _
    $region49: #{tpu_custom_call.1} parent=1 // pred_fallthru
      _
    // Predicated region
    $region50: #{tpu_custom_call.1} parent=1 // pred_check
      _
    $region51: #{tpu_custom_call.1} parent=1 // pred_check_branch
      %50 = sbr.rel (0) target = $region53
    $region52: #{tpu_custom_call.1} parent=1 // pred_region
      _
    $region53: #{tpu_custom_call.1} parent=1 // pred_fallthru
      _
    // Predicated region
    $region54: #{tpu_custom_call.1} parent=1 // pred_check
      _
    $region55: #{tpu_custom_call.1} parent=1 // pred_check_branch
      %52 = sbr.rel (0) target = $region57
    $region56: #{tpu_custom_call.1} parent=1 // pred_region
      _
    $region57: #{tpu_custom_call.1} parent=1 // pred_fallthru
      _
    // Predicated region
    $region58: #{tpu_custom_call.1} parent=1 // pred_check
      _
    $region59: #{tpu_custom_call.1} parent=1 // pred_check_branch
      %54 = sbr.rel (0) target = $region61
    $region60: #{tpu_custom_call.1} parent=1 // pred_region
      _
    $region61: #{tpu_custom_call.1} parent=1 // pred_fallthru
      _
    // Predicated region
    $region62: #{tpu_custom_call.1} parent=1 // pred_check
      _
    $region63: #{tpu_custom_call.1} parent=1 // pred_check_branch
      %56 = sbr.rel (0) target = $region65
    $region64: #{tpu_custom_call.1} parent=1 // pred_region
      _
    $region65: #{tpu_custom_call.1} parent=1 // pred_fallthru
      _
    // Predicated region
    $region66: #{tpu_custom_call.1} parent=1 // pred_check
      _
    $region67: #{tpu_custom_call.1} parent=1 // pred_check_branch
      %58 = sbr.rel (0) target = $region69
    $region68: #{tpu_custom_call.1} parent=1 // pred_region
      _
    $region69: #{tpu_custom_call.1} parent=1 // pred_fallthru
      _
    %v60 = vld [vmem:[%s0] sm:$0xff]
    %v61 = vld [vmem:[%s0 + $0x8] sm:$0xff]
    %v62 = vld [vmem:[%s0 + $0x10] sm:$0xff]
    %v63 = vld [vmem:[%s0 + $0x18] sm:$0xf]
    %v64 = vld [vmem:[%s1] sm:$0xf]
    %v65 = vld [vmem:[%s1 + $0x4] sm:$0xf]
    %v66 = vld [vmem:[%s1 + $0x8] sm:$0xf]
    %v67 = vld [vmem:[%s1 + $0xc] sm:$0xf]
    %v68 = vld [vmem:[%s1 + $0x10] sm:$0xf]
    %v69 = vld [vmem:[%s1 + $0x14] sm:$0xf]
    %v70 = vld [vmem:[%s1 + $0x18] sm:$0xf]
    %v71 = vld [vmem:[%s1 + $0x1c] sm:$0xf]
    %v72 = vld [vmem:[%s1 + $0x20] sm:$0xf]
    %v73 = vld [vmem:[%s1 + $0x24] sm:$0xf]
    %v74 = vld [vmem:[%s1 + $0x28] sm:$0xf]
    %v75 = vld [vmem:[%s1 + $0x2c] sm:$0xf]
    %v76 = vld [vmem:[%s1 + $0x30] sm:$0xf]
    %v77 = vld [vmem:[%s1 + $0x34] sm:$0xf]
    %v78 = vld [vmem:[%s1 + $0x38] sm:$0xf]
    %v79 = vld [vmem:[%s1 + $0x3c] sm:$0xf]
    %v80 = vld [vmem:[%s1 + $0x40] sm:$0xf]
    %v81 = vld [vmem:[%s1 + $0x44] sm:$0xf]
    %v82 = vld [vmem:[%s1 + $0x48] sm:$0xf]
    %v83 = vld [vmem:[%s1 + $0x4c] sm:$0xf]
    %v84 = vld [vmem:[%s1 + $0x50] sm:$0xf]
    %v85 = vld [vmem:[%s1 + $0x54] sm:$0xf]
    %v86 = vld [vmem:[%s1 + $0x58] sm:$0xf]
    %v87 = vld [vmem:[%s1 + $0x5c] sm:$0xf]
    %v88 = vld [vmem:[%s1 + $0x60] sm:$0xf]
    %v89 = vld [vmem:[%s1 + $0x64] sm:$0xf]
    %v90 = vld [vmem:[%s1 + $0x68] sm:$0xf]
    %v91 = vld [vmem:[%s1 + $0x6c] sm:$0xf]
    %v92 = vld [vmem:[%s1 + $0x70] sm:$0xf]
    %v93 = vld [vmem:[%s1 + $0x74] sm:$0xf]
    %v94 = vld [vmem:[%s1 + $0x78] sm:$0xf]
    %v95 = vld [vmem:[%s1 + $0x7c] sm:$0xf]
    %v96 = vld [vmem:[%s1 + $0x80] sm:$0xf]
    %v97 = vld [vmem:[%s1 + $0x84] sm:$0xf]
    %v98 = vld [vmem:[%s1 + $0x88] sm:$0xf]
    %v99 = vld [vmem:[%s1 + $0x8c] sm:$0xf]
    %v100 = vld [vmem:[%s1 + $0x90] sm:$0xf]
    %v101 = vld [vmem:[%s1 + $0x94] sm:$0xf]
    %v102 = vld [vmem:[%s1 + $0x98] sm:$0xf]
    %v103 = vld [vmem:[%s1 + $0x9c] sm:$0xf]
    %v104 = vld [vmem:[%s1 + $0xa0] sm:$0xf]
    %v105 = vld [vmem:[%s1 + $0xa4] sm:$0xf]
    %v106 = vld [vmem:[%s1 + $0xa8] sm:$0xf]
    %v107 = vld [vmem:[%s1 + $0xac] sm:$0xf]
    %v108 = vld [vmem:[%s1 + $0xb0] sm:$0xf]
    %v109 = vld [vmem:[%s1 + $0xb4] sm:$0xf]
    %v110 = vld [vmem:[%s1 + $0xb8] sm:$0xf]
    %v111 = vld [vmem:[%s1 + $0xbc] sm:$0xf]
    %v112 = vld [vmem:[%s1 + $0xc0] sm:$0xf]
    %v113 = vld [vmem:[%s1 + $0xc4] sm:$0xf]
    %v114 = vld [vmem:[%s1 + $0xc8] sm:$0xf]
    %v115 = vld [vmem:[%s1 + $0xcc] sm:$0xf]
    %v116 = vld [vmem:[%s1 + $0xd0] sm:$0xf]
    %v117 = vld [vmem:[%s1 + $0xd4] sm:$0xf]
    %v118 = vld [vmem:[%s1 + $0xd8] sm:$0xf]
    %v119 = vld [vmem:[%s1 + $0xdc] sm:$0xf]
    %v120 = vld [vmem:[%s1 + $0xe0] sm:$0xf]
    %v121 = vld [vmem:[%s1 + $0xe4] sm:$0xf]
    %v122 = vld [vmem:[%s1 + $0xe8] sm:$0xf]
    %v123 = vld [vmem:[%s1 + $0xec] sm:$0xf]
    %v124 = vld [vmem:[%s1 + $0xf0] sm:$0xf]
    %v125 = vld [vmem:[%s1 + $0xf4] sm:$0xf]
    %v126 = vld [vmem:[%s1 + $0xf8] sm:$0xf]
    %v127 = vld [vmem:[%s1 + $0xfc] sm:$0xf]
    %v128 = vld [vmem:[%s1 + $0x100] sm:$0xf]
    %v129 = vld [vmem:[%s1 + $0x104] sm:$0xf]
    %v130 = vld [vmem:[%s1 + $0x108] sm:$0xf]
    %v131 = vld [vmem:[%s1 + $0x10c] sm:$0xf]
    %v132 = vld [vmem:[%s1 + $0x110] sm:$0xf]
    %v133 = vld [vmem:[%s1 + $0x114] sm:$0xf]
    %v134 = vld [vmem:[%s1 + $0x118] sm:$0xf]
    %v135 = vld [vmem:[%s1 + $0x11c] sm:$0xf]
    %v136 = vld [vmem:[%s1 + $0x120] sm:$0xf]
    %v137 = vld [vmem:[%s1 + $0x124] sm:$0xf]
    %v138 = vld [vmem:[%s1 + $0x128] sm:$0xf]
    %v139 = vld [vmem:[%s1 + $0x12c] sm:$0xf]
    %v140 = vld [vmem:[%s1 + $0x130] sm:$0xf]
    %v141 = vld [vmem:[%s1 + $0x134] sm:$0xf]
    %v142 = vld [vmem:[%s1 + $0x138] sm:$0xf]
    %v143 = vld [vmem:[%s1 + $0x13c] sm:$0xf]
    %v144 = vld [vmem:[%s1 + $0x140] sm:$0xf]
    %v145 = vld [vmem:[%s1 + $0x144] sm:$0xf]
    %v146 = vld [vmem:[%s1 + $0x148] sm:$0xf]
    %v147 = vld [vmem:[%s1 + $0x14c] sm:$0xf]
    %v148 = vld [vmem:[%s1 + $0x150] sm:$0xf]
    %v149 = vld [vmem:[%s1 + $0x154] sm:$0xf]
    %v150 = vld [vmem:[%s1 + $0x158] sm:$0xf]
    %v151 = vld [vmem:[%s1 + $0x15c] sm:$0xf]
    %v152 = vld [vmem:[%s1 + $0x160] sm:$0xf]
    %v153 = vld [vmem:[%s1 + $0x164] sm:$0xf]
    %v154 = vld [vmem:[%s1 + $0x168] sm:$0xf]
    %v155 = vld [vmem:[%s1 + $0x16c] sm:$0xf]
    %v156 = vld [vmem:[%s1 + $0x170] sm:$0xf]
    %v157 = vld [vmem:[%s1 + $0x174] sm:$0xf]
    %v158 = vld [vmem:[%s1 + $0x178] sm:$0xf]
    %v159 = vld [vmem:[%s1 + $0x17c] sm:$0xf]
    %v160 = vld [vmem:[%s1 + $0x180] sm:$0xf]
    %v161 = vld [vmem:[%s1 + $0x184] sm:$0xf]
    %v162 = vld [vmem:[%s2] sm:$0x1]
    %v164 = vlaneseq
    %v165 = vshrl.u32 %v164, 7
    %v166 = vsub.s32 0, %v165
    %v167 = vrot.slane %v162, %v166
    %v173 = vunpack.c.l.b16 %v60
    %v174 = vunpack.c.h.b16 %v60
    %v175 = vunpack.c.l.b16 %v61
    %v176 = vunpack.c.h.b16 %v61
    %v177 = vunpack.c.l.b16 %v62
    %v178 = vunpack.c.h.b16 %v62
    %v179 = vunpack.c.l.b16 %v63
    %v180 = vpack.c.b16 %v173, %v173
    %v181 = vpack.c.b16 %v174, %v174
    %v182 = vpack.c.b16 %v175, %v175
    %v183 = vpack.c.b16 %v176, %v176
    %v184 = vpack.c.b16 %v177, %v177
    %v185 = vpack.c.b16 %v178, %v178
    %v186 = vpack.c.b16 %v179, %v179
    %v291 = vunpack.c.l.b16 %v64
    %v292 = vunpack.c.l.b16 %v65
    %v293 = vunpack.c.l.b16 %v66
    %v294 = vunpack.c.l.b16 %v67
    %v295 = vunpack.c.l.b16 %v68
    %v296 = vunpack.c.l.b16 %v69
    %v297 = vunpack.c.l.b16 %v70
    %v298 = vunpack.c.l.b16 %v71
    %v299 = vunpack.c.l.b16 %v72
    %v300 = vunpack.c.l.b16 %v73
    %v301 = vunpack.c.l.b16 %v74
    %v302 = vunpack.c.l.b16 %v75
    %v303 = vunpack.c.l.b16 %v76
    %v304 = vunpack.c.l.b16 %v77
    %v305 = vunpack.c.l.b16 %v78
    %v306 = vunpack.c.l.b16 %v79
    %v307 = vunpack.c.l.b16 %v80
    %v308 = vunpack.c.l.b16 %v81
    %v309 = vunpack.c.l.b16 %v82
    %v310 = vunpack.c.l.b16 %v83
    %v311 = vunpack.c.l.b16 %v84
    %v312 = vunpack.c.l.b16 %v85
    %v313 = vunpack.c.l.b16 %v86
    %v314 = vunpack.c.l.b16 %v87
    %v315 = vunpack.c.l.b16 %v88
    %v316 = vunpack.c.l.b16 %v89
    %v317 = vunpack.c.l.b16 %v90
    %v318 = vunpack.c.l.b16 %v91
    %v319 = vunpack.c.l.b16 %v92
    %v320 = vunpack.c.l.b16 %v93
    %v321 = vunpack.c.l.b16 %v94
    %v322 = vunpack.c.l.b16 %v95
    %v323 = vunpack.c.l.b16 %v96
    %v324 = vunpack.c.l.b16 %v97
    %v325 = vunpack.c.l.b16 %v98
    %v326 = vunpack.c.l.b16 %v99
    %v327 = vunpack.c.l.b16 %v100
    %v328 = vunpack.c.l.b16 %v101
    %v329 = vunpack.c.l.b16 %v102
    %v330 = vunpack.c.l.b16 %v103
    %v331 = vunpack.c.l.b16 %v104
    %v332 = vunpack.c.l.b16 %v105
    %v333 = vunpack.c.l.b16 %v106
    %v334 = vunpack.c.l.b16 %v107
    %v335 = vunpack.c.l.b16 %v108
    %v336 = vunpack.c.l.b16 %v109
    %v337 = vunpack.c.l.b16 %v110
    %v338 = vunpack.c.l.b16 %v111
    %v339 = vunpack.c.l.b16 %v112
    %v340 = vunpack.c.l.b16 %v113
    %v341 = vunpack.c.l.b16 %v114
    %v342 = vunpack.c.l.b16 %v115
    %v343 = vunpack.c.l.b16 %v116
    %v344 = vunpack.c.l.b16 %v117
    %v345 = vunpack.c.l.b16 %v118
    %v346 = vunpack.c.l.b16 %v119
    %v347 = vunpack.c.l.b16 %v120
    %v348 = vunpack.c.l.b16 %v121
    %v349 = vunpack.c.l.b16 %v122
    %v350 = vunpack.c.l.b16 %v123
    %v351 = vunpack.c.l.b16 %v124
    %v352 = vunpack.c.l.b16 %v125
    %v353 = vunpack.c.l.b16 %v126
    %v354 = vunpack.c.l.b16 %v127
    %v355 = vunpack.c.l.b16 %v128
    %v356 = vunpack.c.l.b16 %v129
    %v357 = vunpack.c.l.b16 %v130
    %v358 = vunpack.c.l.b16 %v131
    %v359 = vunpack.c.l.b16 %v132
    %v360 = vunpack.c.l.b16 %v133
    %v361 = vunpack.c.l.b16 %v134
    %v362 = vunpack.c.l.b16 %v135
    %v363 = vunpack.c.l.b16 %v136
    %v364 = vunpack.c.l.b16 %v137
    %v365 = vunpack.c.l.b16 %v138
    %v366 = vunpack.c.l.b16 %v139
    %v367 = vunpack.c.l.b16 %v140
    %v368 = vunpack.c.l.b16 %v141
    %v369 = vunpack.c.l.b16 %v142
    %v370 = vunpack.c.l.b16 %v143
    %v371 = vunpack.c.l.b16 %v144
    %v372 = vunpack.c.l.b16 %v145
    %v373 = vunpack.c.l.b16 %v146
    %v374 = vunpack.c.l.b16 %v147
    %v375 = vunpack.c.l.b16 %v148
    %v376 = vunpack.c.l.b16 %v149
    %v377 = vunpack.c.l.b16 %v150
    %v378 = vunpack.c.l.b16 %v151
    %v379 = vunpack.c.l.b16 %v152
    %v380 = vunpack.c.l.b16 %v153
    %v381 = vunpack.c.l.b16 %v154
    %v382 = vunpack.c.l.b16 %v155
    %v383 = vunpack.c.l.b16 %v156
    %v384 = vunpack.c.l.b16 %v157
    %v385 = vunpack.c.l.b16 %v158
    %v386 = vunpack.c.l.b16 %v159
    %v387 = vunpack.c.l.b16 %v160
    %v388 = vunpack.c.l.b16 %v161
    %v389 = vpack.c.b16 %v292, %v291
    %v390 = vpack.c.b16 %v294, %v293
    %v391 = vpack.c.b16 %v296, %v295
    %v392 = vpack.c.b16 %v298, %v297
    %v393 = vpack.c.b16 %v300, %v299
    %v394 = vpack.c.b16 %v302, %v301
    %v395 = vpack.c.b16 %v304, %v303
    %v396 = vpack.c.b16 %v306, %v305
    %v397 = vpack.c.b16 %v308, %v307
    %v398 = vpack.c.b16 %v310, %v309
    %v399 = vpack.c.b16 %v312, %v311
    %v400 = vpack.c.b16 %v314, %v313
    %v401 = vpack.c.b16 %v316, %v315
    %v402 = vpack.c.b16 %v318, %v317
    %v403 = vpack.c.b16 %v320, %v319
    %v404 = vpack.c.b16 %v322, %v321
    %v405 = vpack.c.b16 %v324, %v323
    %v406 = vpack.c.b16 %v326, %v325
    %v407 = vpack.c.b16 %v328, %v327
    %v408 = vpack.c.b16 %v330, %v329
    %v409 = vpack.c.b16 %v332, %v331
    %v410 = vpack.c.b16 %v334, %v333
    %v411 = vpack.c.b16 %v336, %v335
    %v412 = vpack.c.b16 %v338, %v337
    %v413 = vpack.c.b16 %v340, %v339
    %v414 = vpack.c.b16 %v342, %v341
    %v415 = vpack.c.b16 %v344, %v343
    %v416 = vpack.c.b16 %v346, %v345
    %v417 = vpack.c.b16 %v348, %v347
    %v418 = vpack.c.b16 %v350, %v349
    %v419 = vpack.c.b16 %v352, %v351
    %v420 = vpack.c.b16 %v354, %v353
    %v421 = vpack.c.b16 %v356, %v355
    %v422 = vpack.c.b16 %v358, %v357
    %v423 = vpack.c.b16 %v360, %v359
    %v424 = vpack.c.b16 %v362, %v361
    %v425 = vpack.c.b16 %v364, %v363
    %v426 = vpack.c.b16 %v366, %v365
    %v427 = vpack.c.b16 %v368, %v367
    %v428 = vpack.c.b16 %v370, %v369
    %v429 = vpack.c.b16 %v372, %v371
    %v430 = vpack.c.b16 %v374, %v373
    %v431 = vpack.c.b16 %v376, %v375
    %v432 = vpack.c.b16 %v378, %v377
    %v433 = vpack.c.b16 %v380, %v379
    %v434 = vpack.c.b16 %v382, %v381
    %v435 = vpack.c.b16 %v384, %v383
    %v436 = vpack.c.b16 %v386, %v385
    %v437 = vpack.c.b16 %v388, %v387
    %vm487 = vcmask 130048
    %v489 = vsel %vm487, %v186, 0
    %491 = vmatprep.subr.bf16.mxu0 0
    %492 = vmatpush1.bf16.msra.mxu0 %v389
    %493 = vmatprep.subr.bf16.mxu0 0
    %494 = vmatpush1.bf16.msra.mxu0 %v390
    %495 = vmatprep.subr.bf16.mxu0 0
    %496 = vmatpush1.bf16.msra.mxu0 %v391
    %497 = vmatprep.subr.bf16.mxu0 0
    %498 = vmatpush1.bf16.msra.mxu0 %v392
    %499 = vmatprep.subr.bf16.mxu0 0
    %500 = vmatpush1.bf16.msra.mxu0 %v393
    %501 = vmatprep.subr.bf16.mxu0 0
    %502 = vmatpush1.bf16.msra.mxu0 %v394
    %503 = vmatprep.subr.bf16.mxu0 0
    %504 = vmatpush1.bf16.msra.mxu0 %v395
    %505 = vmatprep.subr.bf16.mxu0 0
    %506 = vmatpush1.bf16.msra.mxu0 %v396
    %507 = vmatprep.subr.bf16.mxu0 0
    %508 = vmatpush1.bf16.msra.mxu0 %v397
    %509 = vmatprep.subr.bf16.mxu0 0
    %510 = vmatpush1.bf16.msra.mxu0 %v398
    %511 = vmatprep.subr.bf16.mxu0 0
    %512 = vmatpush1.bf16.msra.mxu0 %v399
    %513 = vmatprep.subr.bf16.mxu0 0
    %514 = vmatpush1.bf16.msra.mxu0 %v400
    %515 = vmatprep.subr.bf16.mxu0 0
    %516 = vmatpush1.bf16.msra.mxu0 %v401
    %517 = vmatprep.subr.bf16.mxu0 0
    %518 = vmatpush1.bf16.msra.mxu0 %v402
    %519 = vmatprep.subr.bf16.mxu0 0
    %520 = vmatpush1.bf16.msra.mxu0 %v403
    %521 = vmatprep.subr.bf16.mxu0 0
    %522 = vmatpush1.bf16.msra.mxu0 %v404
    %523 = vmatprep.mubr.bf16.mxu0 %v181
    %524 = vmatmul.mubr.bf16.gmra.mrb[0].mxu0 %v180
    %v525 = vpop.f32.mrb[0].mxu0
    %v526 = vadd.f32 %v167, %v525
    %v527 = vpop.f32.mrb[0].mxu0
    %v528 = vpop.f32.mrb[0].mxu0
    %v529 = vpop.f32.mrb[0].mxu0
    %530 = vdwg.mxu0
    %531 = vmatprep.subr.bf16.mxu0 0
    %532 = vmatpush1.bf16.msra.mxu0 %v405
    %533 = vmatprep.subr.bf16.mxu0 0
    %534 = vmatpush1.bf16.msra.mxu0 %v406
    %535 = vmatprep.subr.bf16.mxu0 0
    %536 = vmatpush1.bf16.msra.mxu0 %v407
    %537 = vmatprep.subr.bf16.mxu0 0
    %538 = vmatpush1.bf16.msra.mxu0 %v408
    %539 = vmatprep.subr.bf16.mxu0 0
    %540 = vmatpush1.bf16.msra.mxu0 %v409
    %541 = vmatprep.subr.bf16.mxu0 0
    %542 = vmatpush1.bf16.msra.mxu0 %v410
    %543 = vmatprep.subr.bf16.mxu0 0
    %544 = vmatpush1.bf16.msra.mxu0 %v411
    %545 = vmatprep.subr.bf16.mxu0 0
    %546 = vmatpush1.bf16.msra.mxu0 %v412
    %547 = vmatprep.subr.bf16.mxu0 0
    %548 = vmatpush1.bf16.msra.mxu0 %v413
    %549 = vmatprep.subr.bf16.mxu0 0
    %550 = vmatpush1.bf16.msra.mxu0 %v414
    %551 = vmatprep.subr.bf16.mxu0 0
    %552 = vmatpush1.bf16.msra.mxu0 %v415
    %553 = vmatprep.subr.bf16.mxu0 0
    %554 = vmatpush1.bf16.msra.mxu0 %v416
    %555 = vmatprep.subr.bf16.mxu0 0
    %556 = vmatpush1.bf16.msra.mxu0 %v417
    %557 = vmatprep.subr.bf16.mxu0 0
    %558 = vmatpush1.bf16.msra.mxu0 %v418
    %559 = vmatprep.subr.bf16.mxu0 0
    %560 = vmatpush1.bf16.msra.mxu0 %v419
    %561 = vmatprep.subr.bf16.mxu0 0
    %562 = vmatpush1.bf16.msra.mxu0 %v420
    %563 = vmatprep.mubr.bf16.mxu0 %v183
    %564 = vmatmul.mubr.bf16.gmra.mrb[0].mxu0 %v182
    %v565 = vpop.f32.mrb[0].mxu0
    %v566 = vadd.f32 %v526, %v565
    %v567 = vpop.f32.mrb[0].mxu0
    %v568 = vpop.f32.mrb[0].mxu0
    %v569 = vpop.f32.mrb[0].mxu0
    %570 = vdwg.mxu0
    %571 = vmatprep.subr.bf16.mxu0 0
    %572 = vmatpush1.bf16.msra.mxu0 %v421
    %573 = vmatprep.subr.bf16.mxu0 0
    %574 = vmatpush1.bf16.msra.mxu0 %v422
    %575 = vmatprep.subr.bf16.mxu0 0
    %576 = vmatpush1.bf16.msra.mxu0 %v423
    %577 = vmatprep.subr.bf16.mxu0 0
    %578 = vmatpush1.bf16.msra.mxu0 %v424
    %579 = vmatprep.subr.bf16.mxu0 0
    %580 = vmatpush1.bf16.msra.mxu0 %v425
    %581 = vmatprep.subr.bf16.mxu0 0
    %582 = vmatpush1.bf16.msra.mxu0 %v426
    %583 = vmatprep.subr.bf16.mxu0 0
    %584 = vmatpush1.bf16.msra.mxu0 %v427
    %585 = vmatprep.subr.bf16.mxu0 0
    %586 = vmatpush1.bf16.msra.mxu0 %v428
    %587 = vmatprep.subr.bf16.mxu0 0
    %588 = vmatpush1.bf16.msra.mxu0 %v429
    %589 = vmatprep.subr.bf16.mxu0 0
    %590 = vmatpush1.bf16.msra.mxu0 %v430
    %591 = vmatprep.subr.bf16.mxu0 0
    %592 = vmatpush1.bf16.msra.mxu0 %v431
    %593 = vmatprep.subr.bf16.mxu0 0
    %594 = vmatpush1.bf16.msra.mxu0 %v432
    %595 = vmatprep.subr.bf16.mxu0 0
    %596 = vmatpush1.bf16.msra.mxu0 %v433
    %597 = vmatprep.subr.bf16.mxu0 0
    %598 = vmatpush1.bf16.msra.mxu0 %v434
    %599 = vmatprep.subr.bf16.mxu0 0
    %600 = vmatpush1.bf16.msra.mxu0 %v435
    %601 = vmatprep.subr.bf16.mxu0 0
    %602 = vmatpush1.bf16.msra.mxu0 %v436
    %603 = vmatprep.mubr.bf16.mxu0 %v185
    %604 = vmatmul.mubr.bf16.gmra.mrb[0].mxu0 %v184
    %v605 = vpop.f32.mrb[0].mxu0
    %v606 = vadd.f32 %v566, %v605
    %v607 = vpop.f32.mrb[0].mxu0
    %v608 = vpop.f32.mrb[0].mxu0
    %v609 = vpop.f32.mrb[0].mxu0
    %610 = vdwg.mxu0
    %611 = vmatprep.subr.bf16.mxu0 0
    %612 = vmatpush1.bf16.msra.mxu0 %v437
    %613 = vmatprep.subr.bf16.mxu0 0
    %614 = vmatpush1.bf16.msra.mxu0 0
    %615 = vmatprep.subr.bf16.mxu0 0
    %616 = vmatpush1.bf16.msra.mxu0 0
    %617 = vmatprep.subr.bf16.mxu0 0
    %618 = vmatpush1.bf16.msra.mxu0 0
    %619 = vmatprep.subr.bf16.mxu0 0
    %620 = vmatpush1.bf16.msra.mxu0 0
    %621 = vmatprep.subr.bf16.mxu0 0
    %622 = vmatpush1.bf16.msra.mxu0 0
    %623 = vmatprep.subr.bf16.mxu0 0
    %624 = vmatpush1.bf16.msra.mxu0 0
    %625 = vmatprep.subr.bf16.mxu0 0
    %626 = vmatpush1.bf16.msra.mxu0 0
    %627 = vmatprep.subr.bf16.mxu0 0
    %628 = vmatpush1.bf16.msra.mxu0 0
    %629 = vmatprep.subr.bf16.mxu0 0
    %630 = vmatpush1.bf16.msra.mxu0 0
    %631 = vmatprep.subr.bf16.mxu0 0
    %632 = vmatpush1.bf16.msra.mxu0 0
    %633 = vmatprep.subr.bf16.mxu0 0
    %634 = vmatpush1.bf16.msra.mxu0 0
    %635 = vmatprep.subr.bf16.mxu0 0
    %636 = vmatpush1.bf16.msra.mxu0 0
    %637 = vmatprep.subr.bf16.mxu0 0
    %638 = vmatpush1.bf16.msra.mxu0 0
    %639 = vmatprep.subr.bf16.mxu0 0
    %640 = vmatpush1.bf16.msra.mxu0 0
    %641 = vmatprep.subr.bf16.mxu0 0
    %642 = vmatpush1.bf16.msra.mxu0 0
    %643 = vmatprep.mubr.bf16.mxu0 0
    %644 = vmatmul.mubr.bf16.gmra.mrb[0].mxu0 %v489
    %v645 = vpop.f32.mrb[0].mxu0
    %v646 = vadd.f32 %v606, %v645
    %v647 = vpop.f32.mrb[0].mxu0
    %v648 = vpop.f32.mrb[0].mxu0
    %v649 = vpop.f32.mrb[0].mxu0
    %650 = vdwg.mxu0
    %v651 = vtanh.pop %v646
    %v652 = vpack.c.bf16 %v651, %v651
    %v653 = vld [vmem:[%s3] sm:$0xf]
    %v654 = vld [vmem:[%s3 + $0x4] sm:$0xf]
    %v655 = vld [vmem:[%s3 + $0x8] sm:$0xf]
    %v656 = vld [vmem:[%s3 + $0xc] sm:$0xf]
    %v657 = vld [vmem:[%s3 + $0x10] sm:$0xf]
    %v658 = vld [vmem:[%s3 + $0x14] sm:$0xf]
    %v659 = vld [vmem:[%s3 + $0x18] sm:$0xf]
    %v660 = vld [vmem:[%s3 + $0x1c] sm:$0xf]
    %v661 = vld [vmem:[%s3 + $0x20] sm:$0xf]
    %v662 = vld [vmem:[%s3 + $0x24] sm:$0xf]
    %v663 = vld [vmem:[%s3 + $0x28] sm:$0xf]
    %v664 = vld [vmem:[%s3 + $0x2c] sm:$0xf]
    %v665 = vld [vmem:[%s3 + $0x30] sm:$0xf]
    %v666 = vld [vmem:[%s3 + $0x34] sm:$0xf]
    %v667 = vld [vmem:[%s3 + $0x38] sm:$0xf]
    %v668 = vld [vmem:[%s3 + $0x3c] sm:$0xf]
    %v669 = vld [vmem:[%s4] sm:$0x1]
    %v671 = vlaneseq
    %v672 = vshrl.u32 %v671, 7
    %v673 = vsub.s32 0, %v672
    %v674 = vrot.slane %v669, %v673
    %v692 = vunpack.c.l.b16 %v653
    %v693 = vunpack.c.l.b16 %v654
    %v694 = vunpack.c.l.b16 %v655
    %v695 = vunpack.c.l.b16 %v656
    %v696 = vunpack.c.l.b16 %v657
    %v697 = vunpack.c.l.b16 %v658
    %v698 = vunpack.c.l.b16 %v659
    %v699 = vunpack.c.l.b16 %v660
    %v700 = vunpack.c.l.b16 %v661
    %v701 = vunpack.c.l.b16 %v662
    %v702 = vunpack.c.l.b16 %v663
    %v703 = vunpack.c.l.b16 %v664
    %v704 = vunpack.c.l.b16 %v665
    %v705 = vunpack.c.l.b16 %v666
    %v706 = vunpack.c.l.b16 %v667
    %v707 = vunpack.c.l.b16 %v668
    %v708 = vpack.c.b16 %v693, %v692
    %v709 = vpack.c.b16 %v695, %v694
    %v710 = vpack.c.b16 %v697, %v696
    %v711 = vpack.c.b16 %v699, %v698
    %v712 = vpack.c.b16 %v701, %v700
    %v713 = vpack.c.b16 %v703, %v702
    %v714 = vpack.c.b16 %v705, %v704
    %v715 = vpack.c.b16 %v707, %v706
    %724 = vmatprep.subr.bf16.mxu0 0
    %725 = vmatpush1.bf16.msra.mxu0 %v708
    %726 = vmatprep.subr.bf16.mxu0 0
    %727 = vmatpush1.bf16.msra.mxu0 %v709
    %728 = vmatprep.subr.bf16.mxu0 0
    %729 = vmatpush1.bf16.msra.mxu0 %v710
    %730 = vmatprep.subr.bf16.mxu0 0
    %731 = vmatpush1.bf16.msra.mxu0 %v711
    %732 = vmatprep.subr.bf16.mxu0 0
    %733 = vmatpush1.bf16.msra.mxu0 %v712
    %734 = vmatprep.subr.bf16.mxu0 0
    %735 = vmatpush1.bf16.msra.mxu0 %v713
    %736 = vmatprep.subr.bf16.mxu0 0
    %737 = vmatpush1.bf16.msra.mxu0 %v714
    %738 = vmatprep.subr.bf16.mxu0 0
    %739 = vmatpush1.bf16.msra.mxu0 %v715
    %740 = vmatprep.subr.bf16.mxu0 0
    %741 = vmatpush1.bf16.msra.mxu0 0
    %742 = vmatprep.subr.bf16.mxu0 0
    %743 = vmatpush1.bf16.msra.mxu0 0
    %744 = vmatprep.subr.bf16.mxu0 0
    %745 = vmatpush1.bf16.msra.mxu0 0
    %746 = vmatprep.subr.bf16.mxu0 0
    %747 = vmatpush1.bf16.msra.mxu0 0
    %748 = vmatprep.subr.bf16.mxu0 0
    %749 = vmatpush1.bf16.msra.mxu0 0
    %750 = vmatprep.subr.bf16.mxu0 0
    %751 = vmatpush1.bf16.msra.mxu0 0
    %752 = vmatprep.subr.bf16.mxu0 0
    %753 = vmatpush1.bf16.msra.mxu0 0
    %754 = vmatprep.subr.bf16.mxu0 0
    %755 = vmatpush1.bf16.msra.mxu0 0
    %756 = vmatprep.mubr.bf16.mxu0 0
    %757 = vmatmul.mubr.bf16.gmra.mrb[0].mxu0 %v652
    %v758 = vpop.f32.mrb[0].mxu0
    %v759 = vadd.f32 %v674, %v758
    %v760 = vpop.f32.mrb[0].mxu0
    %v761 = vpop.f32.mrb[0].mxu0
    %v762 = vpop.f32.mrb[0].mxu0
    %763 = vdwg.mxu0
    %v764 = vtanh.pop %v759
    %v765 = vpack.c.bf16 %v764, %v764
    %v766 = vld [vmem:[%s5] sm:$0xf]
    %v767 = vld [vmem:[%s5 + $0x4] sm:$0xf]
    %v768 = vld [vmem:[%s5 + $0x8] sm:$0xf]
    %v769 = vld [vmem:[%s5 + $0xc] sm:$0xf]
    %v770 = vld [vmem:[%s5 + $0x10] sm:$0xf]
    %v771 = vld [vmem:[%s5 + $0x14] sm:$0xf]
    %v772 = vld [vmem:[%s5 + $0x18] sm:$0xf]
    %v773 = vld [vmem:[%s5 + $0x1c] sm:$0xf]
    %v774 = vld [vmem:[%s5 + $0x20] sm:$0xf]
    %v775 = vld [vmem:[%s5 + $0x24] sm:$0xf]
    %v776 = vld [vmem:[%s5 + $0x28] sm:$0xf]
    %v777 = vld [vmem:[%s5 + $0x2c] sm:$0xf]
    %v778 = vld [vmem:[%s5 + $0x30] sm:$0xf]
    %v779 = vld [vmem:[%s5 + $0x34] sm:$0xf]
    %v780 = vld [vmem:[%s5 + $0x38] sm:$0xf]
    %v781 = vld [vmem:[%s5 + $0x3c] sm:$0xf]
    %v782 = vld [vmem:[%s6] sm:$0x1]
    %v784 = vlaneseq
    %v785 = vshrl.u32 %v784, 7
    %v786 = vsub.s32 0, %v785
    %v787 = vrot.slane %v782, %v786
    %v805 = vunpack.c.l.b16 %v766
    %v806 = vunpack.c.l.b16 %v767
    %v807 = vunpack.c.l.b16 %v768
    %v808 = vunpack.c.l.b16 %v769
    %v809 = vunpack.c.l.b16 %v770
    %v810 = vunpack.c.l.b16 %v771
    %v811 = vunpack.c.l.b16 %v772
    %v812 = vunpack.c.l.b16 %v773
    %v813 = vunpack.c.l.b16 %v774
    %v814 = vunpack.c.l.b16 %v775
    %v815 = vunpack.c.l.b16 %v776
    %v816 = vunpack.c.l.b16 %v777
    %v817 = vunpack.c.l.b16 %v778
    %v818 = vunpack.c.l.b16 %v779
    %v819 = vunpack.c.l.b16 %v780
    %v820 = vunpack.c.l.b16 %v781
    %v821 = vpack.c.b16 %v806, %v805
    %v822 = vpack.c.b16 %v808, %v807
    %v823 = vpack.c.b16 %v810, %v809
    %v824 = vpack.c.b16 %v812, %v811
    %v825 = vpack.c.b16 %v814, %v813
    %v826 = vpack.c.b16 %v816, %v815
    %v827 = vpack.c.b16 %v818, %v817
    %v828 = vpack.c.b16 %v820, %v819
    %837 = vmatprep.subr.bf16.mxu0 0
    %838 = vmatpush1.bf16.msra.mxu0 %v821
    %839 = vmatprep.subr.bf16.mxu0 0
    %840 = vmatpush1.bf16.msra.mxu0 %v822
    %841 = vmatprep.subr.bf16.mxu0 0
    %842 = vmatpush1.bf16.msra.mxu0 %v823
    %843 = vmatprep.subr.bf16.mxu0 0
    %844 = vmatpush1.bf16.msra.mxu0 %v824
    %845 = vmatprep.subr.bf16.mxu0 0
    %846 = vmatpush1.bf16.msra.mxu0 %v825
    %847 = vmatprep.subr.bf16.mxu0 0
    %848 = vmatpush1.bf16.msra.mxu0 %v826
    %849 = vmatprep.subr.bf16.mxu0 0
    %850 = vmatpush1.bf16.msra.mxu0 %v827
    %851 = vmatprep.subr.bf16.mxu0 0
    %852 = vmatpush1.bf16.msra.mxu0 %v828
    %853 = vmatprep.subr.bf16.mxu0 0
    %854 = vmatpush1.bf16.msra.mxu0 0
    %855 = vmatprep.subr.bf16.mxu0 0
    %856 = vmatpush1.bf16.msra.mxu0 0
    %857 = vmatprep.subr.bf16.mxu0 0
    %858 = vmatpush1.bf16.msra.mxu0 0
    %859 = vmatprep.subr.bf16.mxu0 0
    %860 = vmatpush1.bf16.msra.mxu0 0
    %861 = vmatprep.subr.bf16.mxu0 0
    %862 = vmatpush1.bf16.msra.mxu0 0
    %863 = vmatprep.subr.bf16.mxu0 0
    %864 = vmatpush1.bf16.msra.mxu0 0
    %865 = vmatprep.subr.bf16.mxu0 0
    %866 = vmatpush1.bf16.msra.mxu0 0
    %867 = vmatprep.subr.bf16.mxu0 0
    %868 = vmatpush1.bf16.msra.mxu0 0
    %869 = vmatprep.mubr.bf16.mxu0 0
    %870 = vmatmul.mubr.bf16.gmra.mrb[0].mxu0 %v765
    %v871 = vpop.f32.mrb[0].mxu0
    %v872 = vadd.f32 %v787, %v871
    %v873 = vpop.f32.mrb[0].mxu0
    %v874 = vpop.f32.mrb[0].mxu0
    %v875 = vpop.f32.mrb[0].mxu0
    %876 = vdwg.mxu0
    %v877 = vtanh.pop %v872
    %v878 = vpack.c.bf16 %v877, %v877
    %v879 = vld [vmem:[%s7] sm:$0xf]
    %v880 = vld [vmem:[%s7 + $0x4] sm:$0xf]
    %v881 = vld [vmem:[%s7 + $0x8] sm:$0xf]
    %v882 = vld [vmem:[%s7 + $0xc] sm:$0xf]
    %v883 = vld [vmem:[%s7 + $0x10] sm:$0xf]
    %v884 = vld [vmem:[%s7 + $0x14] sm:$0xf]
    %v885 = vld [vmem:[%s7 + $0x18] sm:$0xf]
    %v886 = vld [vmem:[%s7 + $0x1c] sm:$0xf]
    %v887 = vld [vmem:[%s7 + $0x20] sm:$0xf]
    %v888 = vld [vmem:[%s7 + $0x24] sm:$0xf]
    %v889 = vld [vmem:[%s7 + $0x28] sm:$0xf]
    %v890 = vld [vmem:[%s7 + $0x2c] sm:$0xf]
    %v891 = vld [vmem:[%s7 + $0x30] sm:$0xf]
    %v892 = vld [vmem:[%s7 + $0x34] sm:$0xf]
    %v893 = vld [vmem:[%s7 + $0x38] sm:$0xf]
    %v894 = vld [vmem:[%s7 + $0x3c] sm:$0xf]
    %v895 = vld [vmem:[%s8] sm:$0x1]
    %v897 = vlaneseq
    %v898 = vshrl.u32 %v897, 7
    %v899 = vsub.s32 0, %v898
    %v900 = vrot.slane %v895, %v899
    %v918 = vunpack.c.l.b16 %v879
    %v919 = vunpack.c.l.b16 %v880
    %v920 = vunpack.c.l.b16 %v881
    %v921 = vunpack.c.l.b16 %v882
    %v922 = vunpack.c.l.b16 %v883
    %v923 = vunpack.c.l.b16 %v884
    %v924 = vunpack.c.l.b16 %v885
    %v925 = vunpack.c.l.b16 %v886
    %v926 = vunpack.c.l.b16 %v887
    %v927 = vunpack.c.l.b16 %v888
    %v928 = vunpack.c.l.b16 %v889
    %v929 = vunpack.c.l.b16 %v890
    %v930 = vunpack.c.l.b16 %v891
    %v931 = vunpack.c.l.b16 %v892
    %v932 = vunpack.c.l.b16 %v893
    %v933 = vunpack.c.l.b16 %v894
    %v934 = vpack.c.b16 %v919, %v918
    %v935 = vpack.c.b16 %v921, %v920
    %v936 = vpack.c.b16 %v923, %v922
    %v937 = vpack.c.b16 %v925, %v924
    %v938 = vpack.c.b16 %v927, %v926
    %v939 = vpack.c.b16 %v929, %v928
    %v940 = vpack.c.b16 %v931, %v930
    %v941 = vpack.c.b16 %v933, %v932
    %950 = vmatprep.subr.bf16.mxu0 0
    %951 = vmatpush1.bf16.msra.mxu0 %v934
    %952 = vmatprep.subr.bf16.mxu0 0
    %953 = vmatpush1.bf16.msra.mxu0 %v935
    %954 = vmatprep.subr.bf16.mxu0 0
    %955 = vmatpush1.bf16.msra.mxu0 %v936
    %956 = vmatprep.subr.bf16.mxu0 0
    %957 = vmatpush1.bf16.msra.mxu0 %v937
    %958 = vmatprep.subr.bf16.mxu0 0
    %959 = vmatpush1.bf16.msra.mxu0 %v938
    %960 = vmatprep.subr.bf16.mxu0 0
    %961 = vmatpush1.bf16.msra.mxu0 %v939
    %962 = vmatprep.subr.bf16.mxu0 0
    %963 = vmatpush1.bf16.msra.mxu0 %v940
    %964 = vmatprep.subr.bf16.mxu0 0
    %965 = vmatpush1.bf16.msra.mxu0 %v941
    %966 = vmatprep.subr.bf16.mxu0 0
    %967 = vmatpush1.bf16.msra.mxu0 0
    %968 = vmatprep.subr.bf16.mxu0 0
    %969 = vmatpush1.bf16.msra.mxu0 0
    %970 = vmatprep.subr.bf16.mxu0 0
    %971 = vmatpush1.bf16.msra.mxu0 0
    %972 = vmatprep.subr.bf16.mxu0 0
    %973 = vmatpush1.bf16.msra.mxu0 0
    %974 = vmatprep.subr.bf16.mxu0 0
    %975 = vmatpush1.bf16.msra.mxu0 0
    %976 = vmatprep.subr.bf16.mxu0 0
    %977 = vmatpush1.bf16.msra.mxu0 0
    %978 = vmatprep.subr.bf16.mxu0 0
    %979 = vmatpush1.bf16.msra.mxu0 0
    %980 = vmatprep.subr.bf16.mxu0 0
    %981 = vmatpush1.bf16.msra.mxu0 0
    %982 = vmatprep.mubr.bf16.mxu0 0
    %983 = vmatmul.mubr.bf16.gmra.mrb[0].mxu0 %v878
    %v984 = vpop.f32.mrb[0].mxu0
    %v985 = vadd.f32 %v900, %v984
    %v986 = vpop.f32.mrb[0].mxu0
    %v987 = vpop.f32.mrb[0].mxu0
    %v988 = vpop.f32.mrb[0].mxu0
    %989 = vdwg.mxu0
    %v990 = vpack.c.bf16 %v985, %v985
    %vm991 = vcmask 19456
    %992 = vst.msk [vmem:[%s17] sm:$0xf] %vm991, %v990
    %v993 = vld [vmem:[%s9] sm:$0xf]
    %v994 = vld [vmem:[%s9 + $0x4] sm:$0xf]
    %v995 = vld [vmem:[%s9 + $0x8] sm:$0xf]
    %v996 = vld [vmem:[%s9 + $0xc] sm:$0xf]
    %v997 = vld [vmem:[%s9 + $0x10] sm:$0xf]
    %v998 = vld [vmem:[%s9 + $0x14] sm:$0xf]
    %v999 = vld [vmem:[%s9 + $0x18] sm:$0xf]
    %v1000 = vld [vmem:[%s9 + $0x1c] sm:$0xf]
    %v1001 = vld [vmem:[%s9 + $0x20] sm:$0xf]
    %v1002 = vld [vmem:[%s9 + $0x24] sm:$0xf]
    %v1003 = vld [vmem:[%s9 + $0x28] sm:$0xf]
    %v1004 = vld [vmem:[%s9 + $0x2c] sm:$0xf]
    %v1005 = vld [vmem:[%s9 + $0x30] sm:$0xf]
    %v1006 = vld [vmem:[%s9 + $0x34] sm:$0xf]
    %v1007 = vld [vmem:[%s9 + $0x38] sm:$0xf]
    %v1008 = vld [vmem:[%s9 + $0x3c] sm:$0xf]
    %v1009 = vld [vmem:[%s10] sm:$0x1]
    %v1011 = vlaneseq
    %v1012 = vshrl.u32 %v1011, 7
    %v1013 = vsub.s32 0, %v1012
    %v1014 = vrot.slane %v1009, %v1013
    %v1032 = vunpack.c.l.b16 %v993
    %v1033 = vunpack.c.l.b16 %v994
    %v1034 = vunpack.c.l.b16 %v995
    %v1035 = vunpack.c.l.b16 %v996
    %v1036 = vunpack.c.l.b16 %v997
    %v1037 = vunpack.c.l.b16 %v998
    %v1038 = vunpack.c.l.b16 %v999
    %v1039 = vunpack.c.l.b16 %v1000
    %v1040 = vunpack.c.l.b16 %v1001
    %v1041 = vunpack.c.l.b16 %v1002
    %v1042 = vunpack.c.l.b16 %v1003
    %v1043 = vunpack.c.l.b16 %v1004
    %v1044 = vunpack.c.l.b16 %v1005
    %v1045 = vunpack.c.l.b16 %v1006
    %v1046 = vunpack.c.l.b16 %v1007
    %v1047 = vunpack.c.l.b16 %v1008
    %v1048 = vpack.c.b16 %v1033, %v1032
    %v1049 = vpack.c.b16 %v1035, %v1034
    %v1050 = vpack.c.b16 %v1037, %v1036
    %v1051 = vpack.c.b16 %v1039, %v1038
    %v1052 = vpack.c.b16 %v1041, %v1040
    %v1053 = vpack.c.b16 %v1043, %v1042
    %v1054 = vpack.c.b16 %v1045, %v1044
    %v1055 = vpack.c.b16 %v1047, %v1046
    %1064 = vmatprep.subr.bf16.mxu0 0
    %1065 = vmatpush1.bf16.msra.mxu0 %v1048
    %1066 = vmatprep.subr.bf16.mxu0 0
    %1067 = vmatpush1.bf16.msra.mxu0 %v1049
    %1068 = vmatprep.subr.bf16.mxu0 0
    %1069 = vmatpush1.bf16.msra.mxu0 %v1050
    %1070 = vmatprep.subr.bf16.mxu0 0
    %1071 = vmatpush1.bf16.msra.mxu0 %v1051
    %1072 = vmatprep.subr.bf16.mxu0 0
    %1073 = vmatpush1.bf16.msra.mxu0 %v1052
    %1074 = vmatprep.subr.bf16.mxu0 0
    %1075 = vmatpush1.bf16.msra.mxu0 %v1053
    %1076 = vmatprep.subr.bf16.mxu0 0
    %1077 = vmatpush1.bf16.msra.mxu0 %v1054
    %1078 = vmatprep.subr.bf16.mxu0 0
    %1079 = vmatpush1.bf16.msra.mxu0 %v1055
    %1080 = vmatprep.subr.bf16.mxu0 0
    %1081 = vmatpush1.bf16.msra.mxu0 0
    %1082 = vmatprep.subr.bf16.mxu0 0
    %1083 = vmatpush1.bf16.msra.mxu0 0
    %1084 = vmatprep.subr.bf16.mxu0 0
    %1085 = vmatpush1.bf16.msra.mxu0 0
    %1086 = vmatprep.subr.bf16.mxu0 0
    %1087 = vmatpush1.bf16.msra.mxu0 0
    %1088 = vmatprep.subr.bf16.mxu0 0
    %1089 = vmatpush1.bf16.msra.mxu0 0
    %1090 = vmatprep.subr.bf16.mxu0 0
    %1091 = vmatpush1.bf16.msra.mxu0 0
    %1092 = vmatprep.subr.bf16.mxu0 0
    %1093 = vmatpush1.bf16.msra.mxu0 0
    %1094 = vmatprep.subr.bf16.mxu0 0
    %1095 = vmatpush1.bf16.msra.mxu0 0
    %1096 = vmatprep.mubr.bf16.mxu0 0
    %1097 = vmatmul.mubr.bf16.gmra.mrb[0].mxu0 %v990
    %v1098 = vpop.f32.mrb[0].mxu0
    %v1099 = vadd.f32 %v1014, %v1098
    %v1100 = vpop.f32.mrb[0].mxu0
    %v1101 = vpop.f32.mrb[0].mxu0
    %v1102 = vpop.f32.mrb[0].mxu0
    %1103 = vdwg.mxu0
    %v1104 = vtanh.pop %v1099
    %v1105 = vpack.c.bf16 %v1104, %v1104
    %v1106 = vld [vmem:[%s11] sm:$0xf]
    %v1107 = vld [vmem:[%s11 + $0x4] sm:$0xf]
    %v1108 = vld [vmem:[%s11 + $0x8] sm:$0xf]
    %v1109 = vld [vmem:[%s11 + $0xc] sm:$0xf]
    %v1110 = vld [vmem:[%s11 + $0x10] sm:$0xf]
    %v1111 = vld [vmem:[%s11 + $0x14] sm:$0xf]
    %v1112 = vld [vmem:[%s11 + $0x18] sm:$0xf]
    %v1113 = vld [vmem:[%s11 + $0x1c] sm:$0xf]
    %v1114 = vld [vmem:[%s11 + $0x20] sm:$0xf]
    %v1115 = vld [vmem:[%s11 + $0x24] sm:$0xf]
    %v1116 = vld [vmem:[%s11 + $0x28] sm:$0xf]
    %v1117 = vld [vmem:[%s11 + $0x2c] sm:$0xf]
    %v1118 = vld [vmem:[%s11 + $0x30] sm:$0xf]
    %v1119 = vld [vmem:[%s11 + $0x34] sm:$0xf]
    %v1120 = vld [vmem:[%s11 + $0x38] sm:$0xf]
    %v1121 = vld [vmem:[%s11 + $0x3c] sm:$0xf]
    %v1122 = vld [vmem:[%s12] sm:$0x1]
    %v1124 = vlaneseq
    %v1125 = vshrl.u32 %v1124, 7
    %v1126 = vsub.s32 0, %v1125
    %v1127 = vrot.slane %v1122, %v1126
    %v1145 = vunpack.c.l.b16 %v1106
    %v1146 = vunpack.c.l.b16 %v1107
    %v1147 = vunpack.c.l.b16 %v1108
    %v1148 = vunpack.c.l.b16 %v1109
    %v1149 = vunpack.c.l.b16 %v1110
    %v1150 = vunpack.c.l.b16 %v1111
    %v1151 = vunpack.c.l.b16 %v1112
    %v1152 = vunpack.c.l.b16 %v1113
    %v1153 = vunpack.c.l.b16 %v1114
    %v1154 = vunpack.c.l.b16 %v1115
    %v1155 = vunpack.c.l.b16 %v1116
    %v1156 = vunpack.c.l.b16 %v1117
    %v1157 = vunpack.c.l.b16 %v1118
    %v1158 = vunpack.c.l.b16 %v1119
    %v1159 = vunpack.c.l.b16 %v1120
    %v1160 = vunpack.c.l.b16 %v1121
    %v1161 = vpack.c.b16 %v1146, %v1145
    %v1162 = vpack.c.b16 %v1148, %v1147
    %v1163 = vpack.c.b16 %v1150, %v1149
    %v1164 = vpack.c.b16 %v1152, %v1151
    %v1165 = vpack.c.b16 %v1154, %v1153
    %v1166 = vpack.c.b16 %v1156, %v1155
    %v1167 = vpack.c.b16 %v1158, %v1157
    %v1168 = vpack.c.b16 %v1160, %v1159
    %1177 = vmatprep.subr.bf16.mxu0 0
    %1178 = vmatpush1.bf16.msra.mxu0 %v1161
    %1179 = vmatprep.subr.bf16.mxu0 0
    %1180 = vmatpush1.bf16.msra.mxu0 %v1162
    %1181 = vmatprep.subr.bf16.mxu0 0
    %1182 = vmatpush1.bf16.msra.mxu0 %v1163
    %1183 = vmatprep.subr.bf16.mxu0 0
    %1184 = vmatpush1.bf16.msra.mxu0 %v1164
    %1185 = vmatprep.subr.bf16.mxu0 0
    %1186 = vmatpush1.bf16.msra.mxu0 %v1165
    %1187 = vmatprep.subr.bf16.mxu0 0
    %1188 = vmatpush1.bf16.msra.mxu0 %v1166
    %1189 = vmatprep.subr.bf16.mxu0 0
    %1190 = vmatpush1.bf16.msra.mxu0 %v1167
    %1191 = vmatprep.subr.bf16.mxu0 0
    %1192 = vmatpush1.bf16.msra.mxu0 %v1168
    %1193 = vmatprep.subr.bf16.mxu0 0
    %1194 = vmatpush1.bf16.msra.mxu0 0
    %1195 = vmatprep.subr.bf16.mxu0 0
    %1196 = vmatpush1.bf16.msra.mxu0 0
    %1197 = vmatprep.subr.bf16.mxu0 0
    %1198 = vmatpush1.bf16.msra.mxu0 0
    %1199 = vmatprep.subr.bf16.mxu0 0
    %1200 = vmatpush1.bf16.msra.mxu0 0
    %1201 = vmatprep.subr.bf16.mxu0 0
    %1202 = vmatpush1.bf16.msra.mxu0 0
    %1203 = vmatprep.subr.bf16.mxu0 0
    %1204 = vmatpush1.bf16.msra.mxu0 0
    %1205 = vmatprep.subr.bf16.mxu0 0
    %1206 = vmatpush1.bf16.msra.mxu0 0
    %1207 = vmatprep.subr.bf16.mxu0 0
    %1208 = vmatpush1.bf16.msra.mxu0 0
    %1209 = vmatprep.mubr.bf16.mxu0 0
    %1210 = vmatmul.mubr.bf16.gmra.mrb[0].mxu0 %v1105
    %v1211 = vpop.f32.mrb[0].mxu0
    %v1212 = vadd.f32 %v1127, %v1211
    %v1213 = vpop.f32.mrb[0].mxu0
    %v1214 = vpop.f32.mrb[0].mxu0
    %v1215 = vpop.f32.mrb[0].mxu0
    %1216 = vdwg.mxu0
    %v1217 = vtanh.pop %v1212
    %v1218 = vpack.c.bf16 %v1217, %v1217
    %v1219 = vld [vmem:[%s13] sm:$0xf]
    %v1220 = vld [vmem:[%s13 + $0x4] sm:$0xf]
    %v1221 = vld [vmem:[%s13 + $0x8] sm:$0xf]
    %v1222 = vld [vmem:[%s13 + $0xc] sm:$0xf]
    %v1223 = vld [vmem:[%s13 + $0x10] sm:$0xf]
    %v1224 = vld [vmem:[%s13 + $0x14] sm:$0xf]
    %v1225 = vld [vmem:[%s13 + $0x18] sm:$0xf]
    %v1226 = vld [vmem:[%s13 + $0x1c] sm:$0xf]
    %v1227 = vld [vmem:[%s13 + $0x20] sm:$0xf]
    %v1228 = vld [vmem:[%s13 + $0x24] sm:$0xf]
    %v1229 = vld [vmem:[%s13 + $0x28] sm:$0xf]
    %v1230 = vld [vmem:[%s13 + $0x2c] sm:$0xf]
    %v1231 = vld [vmem:[%s13 + $0x30] sm:$0xf]
    %v1232 = vld [vmem:[%s13 + $0x34] sm:$0xf]
    %v1233 = vld [vmem:[%s13 + $0x38] sm:$0xf]
    %v1234 = vld [vmem:[%s13 + $0x3c] sm:$0xf]
    %v1235 = vld [vmem:[%s14] sm:$0x1]
    %v1237 = vlaneseq
    %v1238 = vshrl.u32 %v1237, 7
    %v1239 = vsub.s32 0, %v1238
    %v1240 = vrot.slane %v1235, %v1239
    %v1258 = vunpack.c.l.b16 %v1219
    %v1259 = vunpack.c.l.b16 %v1220
    %v1260 = vunpack.c.l.b16 %v1221
    %v1261 = vunpack.c.l.b16 %v1222
    %v1262 = vunpack.c.l.b16 %v1223
    %v1263 = vunpack.c.l.b16 %v1224
    %v1264 = vunpack.c.l.b16 %v1225
    %v1265 = vunpack.c.l.b16 %v1226
    %v1266 = vunpack.c.l.b16 %v1227
    %v1267 = vunpack.c.l.b16 %v1228
    %v1268 = vunpack.c.l.b16 %v1229
    %v1269 = vunpack.c.l.b16 %v1230
    %v1270 = vunpack.c.l.b16 %v1231
    %v1271 = vunpack.c.l.b16 %v1232
    %v1272 = vunpack.c.l.b16 %v1233
    %v1273 = vunpack.c.l.b16 %v1234
    %v1274 = vpack.c.b16 %v1259, %v1258
    %v1275 = vpack.c.b16 %v1261, %v1260
    %v1276 = vpack.c.b16 %v1263, %v1262
    %v1277 = vpack.c.b16 %v1265, %v1264
    %v1278 = vpack.c.b16 %v1267, %v1266
    %v1279 = vpack.c.b16 %v1269, %v1268
    %v1280 = vpack.c.b16 %v1271, %v1270
    %v1281 = vpack.c.b16 %v1273, %v1272
    %1290 = vmatprep.subr.bf16.mxu0 0
    %1291 = vmatpush1.bf16.msra.mxu0 %v1274
    %1292 = vmatprep.subr.bf16.mxu0 0
    %1293 = vmatpush1.bf16.msra.mxu0 %v1275
    %1294 = vmatprep.subr.bf16.mxu0 0
    %1295 = vmatpush1.bf16.msra.mxu0 %v1276
    %1296 = vmatprep.subr.bf16.mxu0 0
    %1297 = vmatpush1.bf16.msra.mxu0 %v1277
    %1298 = vmatprep.subr.bf16.mxu0 0
    %1299 = vmatpush1.bf16.msra.mxu0 %v1278
    %1300 = vmatprep.subr.bf16.mxu0 0
    %1301 = vmatpush1.bf16.msra.mxu0 %v1279
    %1302 = vmatprep.subr.bf16.mxu0 0
    %1303 = vmatpush1.bf16.msra.mxu0 %v1280
    %1304 = vmatprep.subr.bf16.mxu0 0
    %1305 = vmatpush1.bf16.msra.mxu0 %v1281
    %1306 = vmatprep.subr.bf16.mxu0 0
    %1307 = vmatpush1.bf16.msra.mxu0 0
    %1308 = vmatprep.subr.bf16.mxu0 0
    %1309 = vmatpush1.bf16.msra.mxu0 0
    %1310 = vmatprep.subr.bf16.mxu0 0
    %1311 = vmatpush1.bf16.msra.mxu0 0
    %1312 = vmatprep.subr.bf16.mxu0 0
    %1313 = vmatpush1.bf16.msra.mxu0 0
    %1314 = vmatprep.subr.bf16.mxu0 0
    %1315 = vmatpush1.bf16.msra.mxu0 0
    %1316 = vmatprep.subr.bf16.mxu0 0
    %1317 = vmatpush1.bf16.msra.mxu0 0
    %1318 = vmatprep.subr.bf16.mxu0 0
    %1319 = vmatpush1.bf16.msra.mxu0 0
    %1320 = vmatprep.subr.bf16.mxu0 0
    %1321 = vmatpush1.bf16.msra.mxu0 0
    %1322 = vmatprep.mubr.bf16.mxu0 0
    %1323 = vmatmul.mubr.bf16.gmra.mrb[0].mxu0 %v1218
    %v1324 = vpop.f32.mrb[0].mxu0
    %v1325 = vadd.f32 %v1240, %v1324
    %v1326 = vpop.f32.mrb[0].mxu0
    %v1327 = vpop.f32.mrb[0].mxu0
    %v1328 = vpop.f32.mrb[0].mxu0
    %1329 = vdwg.mxu0
    %v1330 = vtanh.pop %v1325
    %v1331 = vpack.c.bf16 %v1330, %v1330
    %v1332 = vld [vmem:[%s15] sm:$0xff]
    %v1333 = vld [vmem:[%s15 + $0x8] sm:$0xff]
    %v1334 = vld [vmem:[%s15 + $0x10] sm:$0xff]
    %v1335 = vld [vmem:[%s15 + $0x18] sm:$0xf]
    %v1336 = vld [vmem:[%s15 + $0x1c] sm:$0xff]
    %v1337 = vld [vmem:[%s15 + $0x24] sm:$0xff]
    %v1338 = vld [vmem:[%s15 + $0x2c] sm:$0xff]
    %v1339 = vld [vmem:[%s15 + $0x34] sm:$0xf]
    %v1340 = vld [vmem:[%s15 + $0x38] sm:$0xff]
    %v1341 = vld [vmem:[%s15 + $0x40] sm:$0xff]
    %v1342 = vld [vmem:[%s15 + $0x48] sm:$0xff]
    %v1343 = vld [vmem:[%s15 + $0x50] sm:$0xf]
    %v1344 = vld [vmem:[%s15 + $0x54] sm:$0xff]
    %v1345 = vld [vmem:[%s15 + $0x5c] sm:$0xff]
    %v1346 = vld [vmem:[%s15 + $0x64] sm:$0xff]
    %v1347 = vld [vmem:[%s15 + $0x6c] sm:$0xf]
    %v1348 = vld [vmem:[%s15 + $0x70] sm:$0xff]
    %v1349 = vld [vmem:[%s15 + $0x78] sm:$0xff]
    %v1350 = vld [vmem:[%s15 + $0x80] sm:$0xff]
    %v1351 = vld [vmem:[%s15 + $0x88] sm:$0xf]
    %v1352 = vld [vmem:[%s15 + $0x8c] sm:$0xff]
    %v1353 = vld [vmem:[%s15 + $0x94] sm:$0xff]
    %v1354 = vld [vmem:[%s15 + $0x9c] sm:$0xff]
    %v1355 = vld [vmem:[%s15 + $0xa4] sm:$0xf]
    %v1356 = vld [vmem:[%s15 + $0xa8] sm:$0xff]
    %v1357 = vld [vmem:[%s15 + $0xb0] sm:$0xff]
    %v1358 = vld [vmem:[%s15 + $0xb8] sm:$0xff]
    %v1359 = vld [vmem:[%s15 + $0xc0] sm:$0xf]
    %v1360 = vld [vmem:[%s15 + $0xc4] sm:$0xff]
    %v1361 = vld [vmem:[%s15 + $0xcc] sm:$0xff]
    %v1362 = vld [vmem:[%s15 + $0xd4] sm:$0xff]
    %v1363 = vld [vmem:[%s15 + $0xdc] sm:$0xf]
    %v1364 = vld [vmem:[%s15 + $0xe0] sm:$0xff]
    %v1365 = vld [vmem:[%s15 + $0xe8] sm:$0xff]
    %v1366 = vld [vmem:[%s15 + $0xf0] sm:$0xff]
    %v1367 = vld [vmem:[%s15 + $0xf8] sm:$0xf]
    %v1368 = vld [vmem:[%s15 + $0xfc] sm:$0xff]
    %v1369 = vld [vmem:[%s15 + $0x104] sm:$0xff]
    %v1370 = vld [vmem:[%s15 + $0x10c] sm:$0xff]
    %v1371 = vld [vmem:[%s15 + $0x114] sm:$0xf]
    %v1372 = vld [vmem:[%s15 + $0x118] sm:$0xff]
    %v1373 = vld [vmem:[%s15 + $0x120] sm:$0xff]
    %v1374 = vld [vmem:[%s15 + $0x128] sm:$0xff]
    %v1375 = vld [vmem:[%s15 + $0x130] sm:$0xf]
    %v1376 = vld [vmem:[%s15 + $0x134] sm:$0xff]
    %v1377 = vld [vmem:[%s15 + $0x13c] sm:$0xff]
    %v1378 = vld [vmem:[%s15 + $0x144] sm:$0xff]
    %v1379 = vld [vmem:[%s15 + $0x14c] sm:$0xf]
    %v1380 = vld [vmem:[%s15 + $0x150] sm:$0xff]
    %v1381 = vld [vmem:[%s15 + $0x158] sm:$0xff]
    %v1382 = vld [vmem:[%s15 + $0x160] sm:$0xff]
    %v1383 = vld [vmem:[%s15 + $0x168] sm:$0xf]
    %v1384 = vld [vmem:[%s15 + $0x16c] sm:$0xff]
    %v1385 = vld [vmem:[%s15 + $0x174] sm:$0xff]
    %v1386 = vld [vmem:[%s15 + $0x17c] sm:$0xff]
    %v1387 = vld [vmem:[%s15 + $0x184] sm:$0xf]
    %v1388 = vld [vmem:[%s15 + $0x188] sm:$0xff]
    %v1389 = vld [vmem:[%s15 + $0x190] sm:$0xff]
    %v1390 = vld [vmem:[%s15 + $0x198] sm:$0xff]
    %v1391 = vld [vmem:[%s15 + $0x1a0] sm:$0xf]
    %v1392 = vld [vmem:[%s15 + $0x1a4] sm:$0xff]
    %v1393 = vld [vmem:[%s15 + $0x1ac] sm:$0xff]
    %v1394 = vld [vmem:[%s15 + $0x1b4] sm:$0xff]
    %v1395 = vld [vmem:[%s15 + $0x1bc] sm:$0xf]
    %v1396 = vld [vmem:[%s16] sm:$0x7f]
    %v1398 = vlaneseq
    %v1399 = vshrl.u32 %v1398, 7
    %v1400 = vsub.s32 0, %v1399
    %v1401 = vrot.slane %v1396, %v1400
    %v1402 = vlaneseq
    %v1403 = vshrl.u32 %v1402, 7
    %v1404 = vsub.s32 1, %v1403
    %v1405 = vrot.slane %v1396, %v1404
    %v1406 = vlaneseq
    %v1407 = vshrl.u32 %v1406, 7
    %v1408 = vsub.s32 2, %v1407
    %v1409 = vrot.slane %v1396, %v1408
    %v1410 = vlaneseq
    %v1411 = vshrl.u32 %v1410, 7
    %v1412 = vsub.s32 3, %v1411
    %v1413 = vrot.slane %v1396, %v1412
    %v1414 = vlaneseq
    %v1415 = vshrl.u32 %v1414, 7
    %v1416 = vsub.s32 4, %v1415
    %v1417 = vrot.slane %v1396, %v1416
    %v1418 = vlaneseq
    %v1419 = vshrl.u32 %v1418, 7
    %v1420 = vsub.s32 5, %v1419
    %v1421 = vrot.slane %v1396, %v1420
    %v1422 = vlaneseq
    %v1423 = vshrl.u32 %v1422, 7
    %v1424 = vsub.s32 6, %v1423
    %v1425 = vrot.slane %v1396, %v1424
    %v1497 = vunpack.c.l.b16 %v1332
    %v1498 = vunpack.c.h.b16 %v1332
    %v1499 = vunpack.c.l.b16 %v1333
    %v1500 = vunpack.c.h.b16 %v1333
    %v1501 = vunpack.c.l.b16 %v1334
    %v1502 = vunpack.c.h.b16 %v1334
    %v1503 = vunpack.c.l.b16 %v1335
    %v1504 = vunpack.c.l.b16 %v1336
    %v1505 = vunpack.c.h.b16 %v1336
    %v1506 = vunpack.c.l.b16 %v1337
    %v1507 = vunpack.c.h.b16 %v1337
    %v1508 = vunpack.c.l.b16 %v1338
    %v1509 = vunpack.c.h.b16 %v1338
    %v1510 = vunpack.c.l.b16 %v1339
    %v1511 = vunpack.c.l.b16 %v1340
    %v1512 = vunpack.c.h.b16 %v1340
    %v1513 = vunpack.c.l.b16 %v1341
    %v1514 = vunpack.c.h.b16 %v1341
    %v1515 = vunpack.c.l.b16 %v1342
    %v1516 = vunpack.c.h.b16 %v1342
    %v1517 = vunpack.c.l.b16 %v1343
    %v1518 = vunpack.c.l.b16 %v1344
    %v1519 = vunpack.c.h.b16 %v1344
    %v1520 = vunpack.c.l.b16 %v1345
    %v1521 = vunpack.c.h.b16 %v1345
    %v1522 = vunpack.c.l.b16 %v1346
    %v1523 = vunpack.c.h.b16 %v1346
    %v1524 = vunpack.c.l.b16 %v1347
    %v1525 = vunpack.c.l.b16 %v1348
    %v1526 = vunpack.c.h.b16 %v1348
    %v1527 = vunpack.c.l.b16 %v1349
    %v1528 = vunpack.c.h.b16 %v1349
    %v1529 = vunpack.c.l.b16 %v1350
    %v1530 = vunpack.c.h.b16 %v1350
    %v1531 = vunpack.c.l.b16 %v1351
    %v1532 = vunpack.c.l.b16 %v1352
    %v1533 = vunpack.c.h.b16 %v1352
    %v1534 = vunpack.c.l.b16 %v1353
    %v1535 = vunpack.c.h.b16 %v1353
    %v1536 = vunpack.c.l.b16 %v1354
    %v1537 = vunpack.c.h.b16 %v1354
    %v1538 = vunpack.c.l.b16 %v1355
    %v1539 = vunpack.c.l.b16 %v1356
    %v1540 = vunpack.c.h.b16 %v1356
    %v1541 = vunpack.c.l.b16 %v1357
    %v1542 = vunpack.c.h.b16 %v1357
    %v1543 = vunpack.c.l.b16 %v1358
    %v1544 = vunpack.c.h.b16 %v1358
    %v1545 = vunpack.c.l.b16 %v1359
    %v1546 = vunpack.c.l.b16 %v1360
    %v1547 = vunpack.c.h.b16 %v1360
    %v1548 = vunpack.c.l.b16 %v1361
    %v1549 = vunpack.c.h.b16 %v1361
    %v1550 = vunpack.c.l.b16 %v1362
    %v1551 = vunpack.c.h.b16 %v1362
    %v1552 = vunpack.c.l.b16 %v1363
    %v1553 = vunpack.c.l.b16 %v1364
    %v1554 = vunpack.c.h.b16 %v1364
    %v1555 = vunpack.c.l.b16 %v1365
    %v1556 = vunpack.c.h.b16 %v1365
    %v1557 = vunpack.c.l.b16 %v1366
    %v1558 = vunpack.c.h.b16 %v1366
    %v1559 = vunpack.c.l.b16 %v1367
    %v1560 = vunpack.c.l.b16 %v1368
    %v1561 = vunpack.c.h.b16 %v1368
    %v1562 = vunpack.c.l.b16 %v1369
    %v1563 = vunpack.c.h.b16 %v1369
    %v1564 = vunpack.c.l.b16 %v1370
    %v1565 = vunpack.c.h.b16 %v1370
    %v1566 = vunpack.c.l.b16 %v1371
    %v1567 = vunpack.c.l.b16 %v1372
    %v1568 = vunpack.c.h.b16 %v1372
    %v1569 = vunpack.c.l.b16 %v1373
    %v1570 = vunpack.c.h.b16 %v1373
    %v1571 = vunpack.c.l.b16 %v1374
    %v1572 = vunpack.c.h.b16 %v1374
    %v1573 = vunpack.c.l.b16 %v1375
    %v1574 = vunpack.c.l.b16 %v1376
    %v1575 = vunpack.c.h.b16 %v1376
    %v1576 = vunpack.c.l.b16 %v1377
    %v1577 = vunpack.c.h.b16 %v1377
    %v1578 = vunpack.c.l.b16 %v1378
    %v1579 = vunpack.c.h.b16 %v1378
    %v1580 = vunpack.c.l.b16 %v1379
    %v1581 = vunpack.c.l.b16 %v1380
    %v1582 = vunpack.c.h.b16 %v1380
    %v1583 = vunpack.c.l.b16 %v1381
    %v1584 = vunpack.c.h.b16 %v1381
    %v1585 = vunpack.c.l.b16 %v1382
    %v1586 = vunpack.c.h.b16 %v1382
    %v1587 = vunpack.c.l.b16 %v1383
    %v1588 = vunpack.c.l.b16 %v1384
    %v1589 = vunpack.c.h.b16 %v1384
    %v1590 = vunpack.c.l.b16 %v1385
    %v1591 = vunpack.c.h.b16 %v1385
    %v1592 = vunpack.c.l.b16 %v1386
    %v1593 = vunpack.c.h.b16 %v1386
    %v1594 = vunpack.c.l.b16 %v1387
    %v1595 = vunpack.c.l.b16 %v1388
    %v1596 = vunpack.c.h.b16 %v1388
    %v1597 = vunpack.c.l.b16 %v1389
    %v1598 = vunpack.c.h.b16 %v1389
    %v1599 = vunpack.c.l.b16 %v1390
    %v1600 = vunpack.c.h.b16 %v1390
    %v1601 = vunpack.c.l.b16 %v1391
    %v1602 = vunpack.c.l.b16 %v1392
    %v1603 = vunpack.c.h.b16 %v1392
    %v1604 = vunpack.c.l.b16 %v1393
    %v1605 = vunpack.c.h.b16 %v1393
    %v1606 = vunpack.c.l.b16 %v1394
    %v1607 = vunpack.c.h.b16 %v1394
    %v1608 = vunpack.c.l.b16 %v1395
    %v1609 = vpack.c.b16 %v1504, %v1497
    %v1610 = vpack.c.b16 %v1505, %v1498
    %v1611 = vpack.c.b16 %v1506, %v1499
    %v1612 = vpack.c.b16 %v1507, %v1500
    %v1613 = vpack.c.b16 %v1508, %v1501
    %v1614 = vpack.c.b16 %v1509, %v1502
    %v1615 = vpack.c.b16 %v1510, %v1503
    %v1616 = vpack.c.b16 %v1518, %v1511
    %v1617 = vpack.c.b16 %v1519, %v1512
    %v1618 = vpack.c.b16 %v1520, %v1513
    %v1619 = vpack.c.b16 %v1521, %v1514
    %v1620 = vpack.c.b16 %v1522, %v1515
    %v1621 = vpack.c.b16 %v1523, %v1516
    %v1622 = vpack.c.b16 %v1524, %v1517
    %v1623 = vpack.c.b16 %v1532, %v1525
    %v1624 = vpack.c.b16 %v1533, %v1526
    %v1625 = vpack.c.b16 %v1534, %v1527
    %v1626 = vpack.c.b16 %v1535, %v1528
    %v1627 = vpack.c.b16 %v1536, %v1529
    %v1628 = vpack.c.b16 %v1537, %v1530
    %v1629 = vpack.c.b16 %v1538, %v1531
    %v1630 = vpack.c.b16 %v1546, %v1539
    %v1631 = vpack.c.b16 %v1547, %v1540
    %v1632 = vpack.c.b16 %v1548, %v1541
    %v1633 = vpack.c.b16 %v1549, %v1542
    %v1634 = vpack.c.b16 %v1550, %v1543
    %v1635 = vpack.c.b16 %v1551, %v1544
    %v1636 = vpack.c.b16 %v1552, %v1545
    %v1637 = vpack.c.b16 %v1560, %v1553
    %v1638 = vpack.c.b16 %v1561, %v1554
    %v1639 = vpack.c.b16 %v1562, %v1555
    %v1640 = vpack.c.b16 %v1563, %v1556
    %v1641 = vpack.c.b16 %v1564, %v1557
    %v1642 = vpack.c.b16 %v1565, %v1558
    %v1643 = vpack.c.b16 %v1566, %v1559
    %v1644 = vpack.c.b16 %v1574, %v1567
    %v1645 = vpack.c.b16 %v1575, %v1568
    %v1646 = vpack.c.b16 %v1576, %v1569
    %v1647 = vpack.c.b16 %v1577, %v1570
    %v1648 = vpack.c.b16 %v1578, %v1571
    %v1649 = vpack.c.b16 %v1579, %v1572
    %v1650 = vpack.c.b16 %v1580, %v1573
    %v1651 = vpack.c.b16 %v1588, %v1581
    %v1652 = vpack.c.b16 %v1589, %v1582
    %v1653 = vpack.c.b16 %v1590, %v1583
    %v1654 = vpack.c.b16 %v1591, %v1584
    %v1655 = vpack.c.b16 %v1592, %v1585
    %v1656 = vpack.c.b16 %v1593, %v1586
    %v1657 = vpack.c.b16 %v1594, %v1587
    %v1658 = vpack.c.b16 %v1602, %v1595
    %v1659 = vpack.c.b16 %v1603, %v1596
    %v1660 = vpack.c.b16 %v1604, %v1597
    %v1661 = vpack.c.b16 %v1605, %v1598
    %v1662 = vpack.c.b16 %v1606, %v1599
    %v1663 = vpack.c.b16 %v1607, %v1600
    %v1664 = vpack.c.b16 %v1608, %v1601
    %1721 = vmatprep.subr.bf16.mxu0 %v1610
    %1722 = vmatpush1.bf16.msra.mxu0 %v1609
    %1723 = vmatprep.subr.bf16.mxu0 %v1617
    %1724 = vmatpush1.bf16.msra.mxu0 %v1616
    %1725 = vmatprep.subr.bf16.mxu0 %v1624
    %1726 = vmatpush1.bf16.msra.mxu0 %v1623
    %1727 = vmatprep.subr.bf16.mxu0 %v1631
    %1728 = vmatpush1.bf16.msra.mxu0 %v1630
    %1729 = vmatprep.subr.bf16.mxu0 %v1638
    %1730 = vmatpush1.bf16.msra.mxu0 %v1637
    %1731 = vmatprep.subr.bf16.mxu0 %v1645
    %1732 = vmatpush1.bf16.msra.mxu0 %v1644
    %1733 = vmatprep.subr.bf16.mxu0 %v1652
    %1734 = vmatpush1.bf16.msra.mxu0 %v1651
    %1735 = vmatprep.subr.bf16.mxu0 %v1659
    %1736 = vmatpush1.bf16.msra.mxu0 %v1658
    %1737 = vmatprep.subr.bf16.mxu0 0
    %1738 = vmatpush1.bf16.msra.mxu0 0
    %1739 = vmatprep.subr.bf16.mxu0 0
    %1740 = vmatpush1.bf16.msra.mxu0 0
    %1741 = vmatprep.subr.bf16.mxu0 0
    %1742 = vmatpush1.bf16.msra.mxu0 0
    %1743 = vmatprep.subr.bf16.mxu0 0
    %1744 = vmatpush1.bf16.msra.mxu0 0
    %1745 = vmatprep.subr.bf16.mxu0 0
    %1746 = vmatpush1.bf16.msra.mxu0 0
    %1747 = vmatprep.subr.bf16.mxu0 0
    %1748 = vmatpush1.bf16.msra.mxu0 0
    %1749 = vmatprep.subr.bf16.mxu0 0
    %1750 = vmatpush1.bf16.msra.mxu0 0
    %1751 = vmatprep.subr.bf16.mxu0 0
    %1752 = vmatpush1.bf16.msra.mxu0 0
    %1753 = vmatprep.mubr.bf16.mxu0 0
    %1754 = vmatmul.mubr.bf16.gmra.mrb[0].mxu0 %v1331
    %v1755 = vpop.f32.mrb[0].mxu0
    %v1756 = vadd.f32 %v1401, %v1755
    %v1757 = vpop.f32.mrb[0].mxu0
    %v1758 = vadd.f32 %v1405, %v1757
    %v1759 = vpop.f32.mrb[0].mxu0
    %v1760 = vpop.f32.mrb[0].mxu0
    %1761 = vdwg.mxu0
    %1762 = vmatprep.subr.bf16.mxu0 %v1612
    %1763 = vmatpush1.bf16.msra.mxu0 %v1611
    %1764 = vmatprep.subr.bf16.mxu0 %v1619
    %1765 = vmatpush1.bf16.msra.mxu0 %v1618
    %1766 = vmatprep.subr.bf16.mxu0 %v1626
    %1767 = vmatpush1.bf16.msra.mxu0 %v1625
    %1768 = vmatprep.subr.bf16.mxu0 %v1633
    %1769 = vmatpush1.bf16.msra.mxu0 %v1632
    %1770 = vmatprep.subr.bf16.mxu0 %v1640
    %1771 = vmatpush1.bf16.msra.mxu0 %v1639
    %1772 = vmatprep.subr.bf16.mxu0 %v1647
    %1773 = vmatpush1.bf16.msra.mxu0 %v1646
    %1774 = vmatprep.subr.bf16.mxu0 %v1654
    %1775 = vmatpush1.bf16.msra.mxu0 %v1653
    %1776 = vmatprep.subr.bf16.mxu0 %v1661
    %1777 = vmatpush1.bf16.msra.mxu0 %v1660
    %1778 = vmatprep.subr.bf16.mxu0 0
    %1779 = vmatpush1.bf16.msra.mxu0 0
    %1780 = vmatprep.subr.bf16.mxu0 0
    %1781 = vmatpush1.bf16.msra.mxu0 0
    %1782 = vmatprep.subr.bf16.mxu0 0
    %1783 = vmatpush1.bf16.msra.mxu0 0
    %1784 = vmatprep.subr.bf16.mxu0 0
    %1785 = vmatpush1.bf16.msra.mxu0 0
    %1786 = vmatprep.subr.bf16.mxu0 0
    %1787 = vmatpush1.bf16.msra.mxu0 0
    %1788 = vmatprep.subr.bf16.mxu0 0
    %1789 = vmatpush1.bf16.msra.mxu0 0
    %1790 = vmatprep.subr.bf16.mxu0 0
    %1791 = vmatpush1.bf16.msra.mxu0 0
    %1792 = vmatprep.subr.bf16.mxu0 0
    %1793 = vmatpush1.bf16.msra.mxu0 0
    %1794 = vmatprep.mubr.bf16.mxu0 0
    %1795 = vmatmul.mubr.bf16.gmra.mrb[0].mxu0 %v1331
    %v1796 = vpop.f32.mrb[0].mxu0
    %v1797 = vadd.f32 %v1409, %v1796
    %v1798 = vpop.f32.mrb[0].mxu0
    %v1799 = vadd.f32 %v1413, %v1798
    %v1800 = vpop.f32.mrb[0].mxu0
    %v1801 = vpop.f32.mrb[0].mxu0
    %1802 = vdwg.mxu0
    %1803 = vmatprep.subr.bf16.mxu0 %v1614
    %1804 = vmatpush1.bf16.msra.mxu0 %v1613
    %1805 = vmatprep.subr.bf16.mxu0 %v1621
    %1806 = vmatpush1.bf16.msra.mxu0 %v1620
    %1807 = vmatprep.subr.bf16.mxu0 %v1628
    %1808 = vmatpush1.bf16.msra.mxu0 %v1627
    %1809 = vmatprep.subr.bf16.mxu0 %v1635
    %1810 = vmatpush1.bf16.msra.mxu0 %v1634
    %1811 = vmatprep.subr.bf16.mxu0 %v1642
    %1812 = vmatpush1.bf16.msra.mxu0 %v1641
    %1813 = vmatprep.subr.bf16.mxu0 %v1649
    %1814 = vmatpush1.bf16.msra.mxu0 %v1648
    %1815 = vmatprep.subr.bf16.mxu0 %v1656
    %1816 = vmatpush1.bf16.msra.mxu0 %v1655
    %1817 = vmatprep.subr.bf16.mxu0 %v1663
    %1818 = vmatpush1.bf16.msra.mxu0 %v1662
    %1819 = vmatprep.subr.bf16.mxu0 0
    %1820 = vmatpush1.bf16.msra.mxu0 0
    %1821 = vmatprep.subr.bf16.mxu0 0
    %1822 = vmatpush1.bf16.msra.mxu0 0
    %1823 = vmatprep.subr.bf16.mxu0 0
    %1824 = vmatpush1.bf16.msra.mxu0 0
    %1825 = vmatprep.subr.bf16.mxu0 0
    %1826 = vmatpush1.bf16.msra.mxu0 0
    %1827 = vmatprep.subr.bf16.mxu0 0
    %1828 = vmatpush1.bf16.msra.mxu0 0
    %1829 = vmatprep.subr.bf16.mxu0 0
    %1830 = vmatpush1.bf16.msra.mxu0 0
    %1831 = vmatprep.subr.bf16.mxu0 0
    %1832 = vmatpush1.bf16.msra.mxu0 0
    %1833 = vmatprep.subr.bf16.mxu0 0
    %1834 = vmatpush1.bf16.msra.mxu0 0
    %1835 = vmatprep.mubr.bf16.mxu0 0
    %1836 = vmatmul.mubr.bf16.gmra.mrb[0].mxu0 %v1331
    %v1837 = vpop.f32.mrb[0].mxu0
    %v1838 = vadd.f32 %v1417, %v1837
    %v1839 = vpop.f32.mrb[0].mxu0
    %v1840 = vadd.f32 %v1421, %v1839
    %v1841 = vpop.f32.mrb[0].mxu0
    %v1842 = vpop.f32.mrb[0].mxu0
    %1843 = vdwg.mxu0
    %1844 = vmatprep.subr.bf16.mxu0 0
    %1845 = vmatpush1.bf16.msra.mxu0 %v1615
    %1846 = vmatprep.subr.bf16.mxu0 0
    %1847 = vmatpush1.bf16.msra.mxu0 %v1622
    %1848 = vmatprep.subr.bf16.mxu0 0
    %1849 = vmatpush1.bf16.msra.mxu0 %v1629
    %1850 = vmatprep.subr.bf16.mxu0 0
    %1851 = vmatpush1.bf16.msra.mxu0 %v1636
    %1852 = vmatprep.subr.bf16.mxu0 0
    %1853 = vmatpush1.bf16.msra.mxu0 %v1643
    %1854 = vmatprep.subr.bf16.mxu0 0
    %1855 = vmatpush1.bf16.msra.mxu0 %v1650
    %1856 = vmatprep.subr.bf16.mxu0 0
    %1857 = vmatpush1.bf16.msra.mxu0 %v1657
    %1858 = vmatprep.subr.bf16.mxu0 0
    %1859 = vmatpush1.bf16.msra.mxu0 %v1664
    %1860 = vmatprep.subr.bf16.mxu0 0
    %1861 = vmatpush1.bf16.msra.mxu0 0
    %1862 = vmatprep.subr.bf16.mxu0 0
    %1863 = vmatpush1.bf16.msra.mxu0 0
    %1864 = vmatprep.subr.bf16.mxu0 0
    %1865 = vmatpush1.bf16.msra.mxu0 0
    %1866 = vmatprep.subr.bf16.mxu0 0
    %1867 = vmatpush1.bf16.msra.mxu0 0
    %1868 = vmatprep.subr.bf16.mxu0 0
    %1869 = vmatpush1.bf16.msra.mxu0 0
    %1870 = vmatprep.subr.bf16.mxu0 0
    %1871 = vmatpush1.bf16.msra.mxu0 0
    %1872 = vmatprep.subr.bf16.mxu0 0
    %1873 = vmatpush1.bf16.msra.mxu0 0
    %1874 = vmatprep.subr.bf16.mxu0 0
    %1875 = vmatpush1.bf16.msra.mxu0 0
    %1876 = vmatprep.mubr.bf16.mxu0 0
    %1877 = vmatmul.mubr.bf16.gmra.mrb[0].mxu0 %v1331
    %v1878 = vpop.f32.mrb[0].mxu0
    %v1879 = vadd.f32 %v1425, %v1878
    %v1880 = vpop.f32.mrb[0].mxu0
    %v1881 = vpop.f32.mrb[0].mxu0
    %v1882 = vpop.f32.mrb[0].mxu0
    %1883 = vdwg.mxu0
    %v1884 = vxor.u32 %v1756, 2147483648
    %v1885 = vxor.u32 %v1758, 2147483648
    %v1886 = vxor.u32 %v1797, 2147483648
    %v1887 = vxor.u32 %v1799, 2147483648
    %v1888 = vxor.u32 %v1838, 2147483648
    %v1889 = vxor.u32 %v1840, 2147483648
    %v1890 = vxor.u32 %v1879, 2147483648
    %v1891 = vmul.f32 %v1884, 1.442695
    %v1892 = vpow.pop %v1891
    %v1893 = vmul.f32 %v1885, 1.442695
    %v1894 = vpow.pop %v1893
    %v1895 = vmul.f32 %v1886, 1.442695
    %v1896 = vpow.pop %v1895
    %v1897 = vmul.f32 %v1887, 1.442695
    %v1898 = vpow.pop %v1897
    %v1899 = vmul.f32 %v1888, 1.442695
    %v1900 = vpow.pop %v1899
    %v1901 = vmul.f32 %v1889, 1.442695
    %v1902 = vpow.pop %v1901
    %v1903 = vmul.f32 %v1890, 1.442695
    %v1904 = vpow.pop %v1903
    %v1905 = vadd.f32 %v1892, 1.0
    %v1906 = vadd.f32 %v1894, 1.0
    %v1907 = vadd.f32 %v1896, 1.0
    %v1908 = vadd.f32 %v1898, 1.0
    %v1909 = vadd.f32 %v1900, 1.0
    %v1910 = vadd.f32 %v1902, 1.0
    %v1911 = vadd.f32 %v1904, 1.0
    %v1912 = vrcp.pop %v1905
    %v1913 = vmul.f32 1.0, %v1912
    %v1914 = vrcp.pop %v1906
    %v1915 = vmul.f32 1.0, %v1914
    %v1916 = vrcp.pop %v1907
    %v1917 = vmul.f32 1.0, %v1916
    %v1918 = vrcp.pop %v1908
    %v1919 = vmul.f32 1.0, %v1918
    %v1920 = vrcp.pop %v1909
    %v1921 = vmul.f32 1.0, %v1920
    %v1922 = vrcp.pop %v1910
    %v1923 = vmul.f32 1.0, %v1922
    %v1924 = vrcp.pop %v1911
    %v1925 = vmul.f32 1.0, %v1924
    %v1926 = vpack.c.bf16 %v1913, %v1913
    %v1927 = vpack.c.bf16 %v1915, %v1915
    %v1928 = vpack.c.bf16 %v1917, %v1917
    %v1929 = vpack.c.bf16 %v1919, %v1919
    %v1930 = vpack.c.bf16 %v1921, %v1921
    %v1931 = vpack.c.bf16 %v1923, %v1923
    %v1932 = vpack.c.bf16 %v1925, %v1925
    %v1940 = vunpack.c.l.b16 %v1926
    %v1941 = vunpack.c.l.b16 %v1927
    %v1942 = vunpack.c.l.b16 %v1928
    %v1943 = vunpack.c.l.b16 %v1929
    %v1944 = vunpack.c.l.b16 %v1930
    %v1945 = vunpack.c.l.b16 %v1931
    %v1946 = vunpack.c.l.b16 %v1932
    %v1947 = vpack.c.b16 %v1941, %v1940
    %v1948 = vpack.c.b16 %v1943, %v1942
    %v1949 = vpack.c.b16 %v1945, %v1944
    %v1950 = vpack.c.b16 %v1946, %v1946
    %1955 = vst [vmem:[#allocation2] sm:$0xff] %v1947
    %1956 = vst [vmem:[#allocation2 + $0x8] sm:$0xff] %v1948
    %1957 = vst [vmem:[#allocation2 + $0x10] sm:$0xff] %v1949
    %vm1958 = vcmask 125952
    %1959 = vst.msk [vmem:[#allocation2 + $0x18] sm:$0xf] %vm1958, %v1950
    // Predicated region
    $region70: #{tpu_custom_call.1} parent=1 // pred_check
      _
    $region71: #{tpu_custom_call.1} parent=1 // pred_check_branch
      %1961 = sbr.rel (0) target = $region73
    $region72: #{tpu_custom_call.1} parent=1 // pred_region
      _
    $region73: #{tpu_custom_call.1} parent=1 // pred_fallthru
      _
    // Predicated region
    $region74: #{tpu_custom_call.1} parent=1 // pred_check
      _
    $region75: #{tpu_custom_call.1} parent=1 // pred_check_branch
      %1963 = sbr.rel (0) target = $region77
    $region76: #{tpu_custom_call.1} parent=1 // pred_region
      %s1965 = ssub.s32 448, 448
      %1966 = vsyncadd [#allocation3], %s1965
      %s1968 = sshll.u32 [#allocation2], 4
      %s1969 = int_to_ptr.vmem [resolvable:$true] %s1968
      %1971 = dma.vmem_to_hbm [thread:$0]  %s1969, 448, %s18, [#allocation3]
    $region77: #{tpu_custom_call.1} parent=1 // pred_fallthru
      _
    // Predicated region
    $region78: #{tpu_custom_call.1} parent=1 // pred_check
      _
    $region79: #{tpu_custom_call.1} parent=1 // pred_check_branch
      %1973 = sbr.rel (0) target = $region81
    $region80: #{tpu_custom_call.1} parent=1 // pred_region
      _
    $region81: #{tpu_custom_call.1} parent=1 // pred_fallthru
      _
    // Predicated region
    $region82: #{tpu_custom_call.1} parent=1 // pred_check
      _
    $region83: #{tpu_custom_call.1} parent=1 // pred_check_branch
      %1975 = sbr.rel (0) target = $region85
    $region84: #{tpu_custom_call.1} parent=1 // pred_region
      %1976 = dma.done [#allocation3], 448
    $region85: #{tpu_custom_call.1} parent=1 // pred_fallthru
      _
    %1977 = vsyncpa [#allocation3], 1

</llo_original>
